<compile_context>
chip_gen: v7x
topology: tpu7x:2x2x1
jax: 0.10.0
libtpu: 0.0.40
codegen_flags: <defaults>
</compile_context>

<pallas_src>
import functools

import jax
import jax.numpy as jnp
from jax import lax
from jax.experimental import pallas as pl
from jax.experimental.pallas import tpu as pltpu

_BN_EPS = 1e-5


def _nonlocal_kernel(x_ref, wqkv_ref, bqkv_ref, wout_ref, bout_ref,
                     out_ref, pg_ref, pool_ref, *, H, W, IC):
    """Fused NonLocalBlock forward for one batch element.

    x_ref:    (1, C, N)   channel-first, N = H*W lane-dense
    wqkv_ref: (C, 3*IC)   stacked [theta | phi | g] 1x1-conv weights (transposed)
    bqkv_ref: (1, 3*IC)   stacked biases
    wout_ref: (C, IC)     W 1x1-conv weight with BatchNorm scale folded in
    bout_ref: (C, 1)      folded W-bias + BatchNorm shift
    out_ref:  (1, C, N)
    pg_ref:   (N, 2*IC)   VMEM scratch: [phi | g] staged for strided pooling
    pool_ref: (Ns, 2*IC)  VMEM scratch: 2x2 max-pooled [phi | g]
    """
    N = H * W
    Hs, Ws = H // 2, W // 2

    x = x_ref[0]                                                   # (C, N)

    # Fused theta/phi/g projection as one MXU matmul producing the spatially-major
    # (N, 3*IC) orientation needed downstream (contract the channel axes directly).
    proj = lax.dot_general(x, wqkv_ref[...],
                           (((0,), (0,)), ((), ())),
                           preferred_element_type=jnp.float32) + bqkv_ref[...]   # (N, 3IC)
    theta = proj[:, :IC]                                           # (N, IC)
    pg_ref[...] = proj[:, IC:]                                     # (N, 2IC) = [phi | g]

    # sub_sample=True: 2x2 max-pool of phi and g, in-kernel.  Rows of pg_ref are
    # h-major (n = h*W + w); for each pooled row hs we grab both source rows
    # (h = 2hs, 2hs+1) with a stride-2 sublane load (even w / odd w) and reduce.
    for hs in range(Hs):                                           # static unroll (Hs = 8)
        base = (2 * hs) * W
        even_w = pg_ref[pl.ds(base, 2 * Ws, stride=2), :]          # (2*Ws, 2IC)
        odd_w = pg_ref[pl.ds(base + 1, 2 * Ws, stride=2), :]       # (2*Ws, 2IC)
        wmax = jnp.maximum(even_w, odd_w)                          # rows 0..Ws-1: h=2hs, rest: h=2hs+1
        pool_ref[hs * Ws:(hs + 1) * Ws, :] = jnp.maximum(wmax[:Ws, :], wmax[Ws:, :])

    pooled = pool_ref[...]                                         # (Ns, 2IC)
    phi_p = pooled[:, :IC]                                         # (Ns, IC)
    g_p = pooled[:, IC:]                                           # (Ns, IC)

    # f = theta @ phi^T without materializing a transpose (contract the IC axes).
    f = lax.dot_general(theta, phi_p, (((1,), (1,)), ((), ())),
                        preferred_element_type=jnp.float32)        # (N, Ns)

    # softmax over keys; denominator via the EUP approximate reciprocal.
    m = jnp.max(f, axis=-1, keepdims=True)
    p = jnp.exp(f - m)
    s = jnp.sum(p, axis=-1, keepdims=True)
    p = p * pl.reciprocal(s, approx=True)

    y = jnp.dot(p, g_p, preferred_element_type=jnp.float32)        # (N, IC)

    # W 1x1 conv with BatchNorm folded into (wout, bout), back to channel-first,
    # plus the residual.
    wy = lax.dot_general(wout_ref[...], y, (((1,), (1,)), ((), ())),
                         preferred_element_type=jnp.float32)       # (C, N)
    out_ref[0] = wy + bout_ref[...] + x


def _prepare(params):
    """Stack the q/k/v 1x1-conv weights and fold BatchNorm into the W conv (tiny arrays)."""
    w_qkv = jnp.concatenate(
        [params["theta_w"], params["phi_w"], params["g_w"]], axis=0).T       # (C, 3IC)
    b_qkv = jnp.concatenate(
        [params["theta_b"], params["phi_b"], params["g_b"]], axis=0)[None, :]  # (1, 3IC)
    scale = params["bn_gamma"] * lax.rsqrt(params["bn_var"] + _BN_EPS)       # (C,)
    shift = params["bn_beta"] - params["bn_mean"] * scale                    # (C,)
    w_out = params["w_w"] * scale[:, None]                                   # (C, IC)
    b_out = (params["w_b"] * scale + shift)[:, None]                         # (C, 1)
    return w_qkv, b_qkv, w_out, b_out


@jax.jit
def non_local_block(x, params):
    """NonLocalBlock forward.  x: (B, C, H, W) float32 -> (B, C, H, W)."""
    B, C, H, W = x.shape
    IC = params["theta_w"].shape[0]
    N = H * W
    Ns = (H // 2) * (W // 2)

    w_qkv, b_qkv, w_out, b_out = _prepare(params)
    x_flat = x.reshape(B, C, N)      # free: NCHW is already channel-first / contiguous

    kernel = functools.partial(_nonlocal_kernel, H=H, W=W, IC=IC)
    z = pl.pallas_call(
        kernel,
        grid=(B,),
        in_specs=[
            pl.BlockSpec((1, C, N), lambda b: (b, 0, 0)),
            pl.BlockSpec((C, 3 * IC), lambda b: (0, 0)),
            pl.BlockSpec((1, 3 * IC), lambda b: (0, 0)),
            pl.BlockSpec((C, IC), lambda b: (0, 0)),
            pl.BlockSpec((C, 1), lambda b: (0, 0)),
        ],
        out_specs=pl.BlockSpec((1, C, N), lambda b: (b, 0, 0)),
        out_shape=jax.ShapeDtypeStruct((B, C, N), jnp.float32),
        scratch_shapes=[
            pltpu.VMEM((N, 2 * IC), jnp.float32),
            pltpu.VMEM((Ns, 2 * IC), jnp.float32),
        ],
        input_output_aliases={0: 0},
        compiler_params=pltpu.CompilerParams(dimension_semantics=("parallel",)),
    )(x_flat, w_qkv, b_qkv, w_out, b_out)

    return z.reshape(B, C, H, W)     # free reshape back to NCHW


def reference(x, params):
    """Pure-JAX mirror of the PyTorch module forward (NCHW in / NCHW out)."""
    B, C, H, W = x.shape
    IC = params["theta_w"].shape[0]

    def conv1x1(v, w, b):
        return jnp.einsum("bchw,oc->bohw", v, w) + b[None, :, None, None]

    theta = conv1x1(x, params["theta_w"], params["theta_b"])
    phi = conv1x1(x, params["phi_w"], params["phi_b"])
    g = conv1x1(x, params["g_w"], params["g_b"])

    def pool2x2(v):
        return jnp.max(v.reshape(B, IC, H // 2, 2, W // 2, 2), axis=(3, 5))

    phi, g = pool2x2(phi), pool2x2(g)
    theta_x = theta.reshape(B, IC, H * W).transpose(0, 2, 1)          # (B, N, IC)
    phi_x = phi.reshape(B, IC, -1)                                    # (B, IC, Ns)
    g_x = g.reshape(B, IC, -1).transpose(0, 2, 1)                     # (B, Ns, IC)
    f = jnp.einsum("bni,bim->bnm", theta_x, phi_x)
    f = jax.nn.softmax(f, axis=-1)
    y = jnp.einsum("bnm,bmi->bni", f, g_x)
    y = y.transpose(0, 2, 1).reshape(B, IC, H, W)
    wy = conv1x1(y, params["w_w"], params["w_b"])
    inv = lax.rsqrt(params["bn_var"] + _BN_EPS)[None, :, None, None]
    bn = ((wy - params["bn_mean"][None, :, None, None]) * inv
          * params["bn_gamma"][None, :, None, None]
          + params["bn_beta"][None, :, None, None])
    return bn + x


if __name__ == "__main__":
    B, C, H, W = 2, 4, 16, 16
    IC = max(C // 2, 1)             # inter_channels = in_channels // 2

    key = jax.random.PRNGKey(0)
    ks = jax.random.split(key, 9)
    x = jax.random.normal(ks[0], (B, C, H, W), jnp.float32)

    params = {
        # 1x1 conv weights in PyTorch (out_ch, in_ch) layout; biases (out_ch,).
        "theta_w": 0.1 * jax.random.normal(ks[1], (IC, C), jnp.float32),
        "theta_b": 0.1 * jax.random.normal(ks[2], (IC,), jnp.float32),
        "phi_w": 0.1 * jax.random.normal(ks[3], (IC, C), jnp.float32),
        "phi_b": 0.1 * jax.random.normal(ks[4], (IC,), jnp.float32),
        "g_w": 0.1 * jax.random.normal(ks[5], (IC, C), jnp.float32),
        "g_b": 0.1 * jax.random.normal(ks[6], (IC,), jnp.float32),
        "w_w": 0.1 * jax.random.normal(ks[7], (C, IC), jnp.float32),
        "w_b": 0.1 * jax.random.normal(ks[8], (C,), jnp.float32),
        # BatchNorm2d: the module constant-inits weight(gamma)=0 and bias(beta)=0.
        "bn_gamma": jnp.zeros((C,), jnp.float32),
        "bn_beta": jnp.zeros((C,), jnp.float32),
        # TODO(synk): PyTorch training-mode BN would use batch statistics; with the
        # module's gamma=0 init the output is identically x either way, so eval-mode
        # running stats are used here.
        "bn_mean": jnp.zeros((C,), jnp.float32),
        "bn_var": jnp.ones((C,), jnp.float32),
    }

    z = jax.block_until_ready(non_local_block(x, params))
    assert z.shape == x.shape
    if not jnp.allclose(z, reference(x, params), atol=1e-5, rtol=1e-5):
        raise AssertionError("Pallas output mismatch vs reference (module init params)")

    # Second check with non-trivial BN parameters so the attention / W / BN path is
    # exercised numerically (with the module's zero-init gamma it reduces to z == x).
    kb = jax.random.split(jax.random.PRNGKey(1), 4)
    params_nz = dict(params)
    params_nz["bn_gamma"] = 0.5 + 0.1 * jax.random.normal(kb[0], (C,), jnp.float32)
    params_nz["bn_beta"] = 0.1 * jax.random.normal(kb[1], (C,), jnp.float32)
    params_nz["bn_mean"] = 0.1 * jax.random.normal(kb[2], (C,), jnp.float32)
    params_nz["bn_var"] = 1.0 + 0.1 * jax.random.uniform(kb[3], (C,), jnp.float32)
    z_nz = jax.block_until_ready(non_local_block(x, params_nz))
    # pl.reciprocal(approx=True) in the in-kernel softmax => slightly looser tolerance.
    if not jnp.allclose(z_nz, reference(x, params_nz), atol=1e-2, rtol=1e-2):
        raise AssertionError("Pallas output mismatch vs reference (nonzero BN params)")

    print("KERNEL_OK")
</pallas_src>

<mosaic_0001>
module attributes {stable_mosaic.version = 11 : i64} {
  func.func @_nonlocal_kernel(%arg0: i32, %arg1: memref<1x4x256xf32, #tpu.memory_space<vmem>>, %arg2: memref<4x6xf32, #tpu.memory_space<vmem>>, %arg3: memref<1x6xf32, #tpu.memory_space<vmem>>, %arg4: memref<4x2xf32, #tpu.memory_space<vmem>>, %arg5: memref<4x1xf32, #tpu.memory_space<vmem>>, %arg6: memref<1x4x256xf32, #tpu.memory_space<vmem>>, %arg7: memref<256x4xf32, #tpu.memory_space<vmem>>, %arg8: memref<64x4xf32, #tpu.memory_space<vmem>>) attributes {dimension_semantics = [#tpu.dimension_semantics<parallel>], iteration_bounds = array<i64: 2>, scalar_prefetch = 0 : i64, scratch_operands = 2 : i64, tpu.core_type = #tpu.core_type<tc>, window_params = [{transform_indices = @transform_0, window_bounds = array<i64: 1, 4, 256>}, {pipeline_mode = #tpu.pipeline_mode<synchronous>, transform_indices = @transform_1, window_bounds = array<i64: 4, 6>}, {pipeline_mode = #tpu.pipeline_mode<synchronous>, transform_indices = @transform_2, window_bounds = array<i64: 1, 6>}, {pipeline_mode = #tpu.pipeline_mode<synchronous>, transform_indices = @transform_3, window_bounds = array<i64: 4, 2>}, {pipeline_mode = #tpu.pipeline_mode<synchronous>, transform_indices = @transform_4, window_bounds = array<i64: 4, 1>}, {transform_indices = @transform_5, window_bounds = array<i64: 1, 4, 256>}]} {
    %c0 = arith.constant 0 : index
    %c0_0 = arith.constant 0 : index
    %c0_1 = arith.constant 0 : index
    %0 = vector.load %arg1[%c0, %c0_0, %c0_1] : memref<1x4x256xf32, #tpu.memory_space<vmem>>, vector<1x4x256xf32>
    %1 = vector.shape_cast %0 : vector<1x4x256xf32> to vector<4x256xf32>
    %c0_2 = arith.constant 0 : index
    %c0_3 = arith.constant 0 : index
    %2 = vector.load %arg2[%c0_2, %c0_3] : memref<4x6xf32, #tpu.memory_space<vmem>>, vector<4x6xf32>
    %cst = arith.constant dense<0.000000e+00> : vector<256x6xf32>
    %3 = tpu.matmul %1, %2, %cst {dimension_numbers = #tpu.dot_dimension_numbers<[0], [0], [1], [1], [0, 1, 1, 1], [], []>} : vector<4x256xf32>, vector<4x6xf32>, vector<256x6xf32> -> vector<256x6xf32>
    %c0_4 = arith.constant 0 : index
    %c0_5 = arith.constant 0 : index
    %4 = vector.load %arg3[%c0_4, %c0_5] : memref<1x6xf32, #tpu.memory_space<vmem>>, vector<1x6xf32>
    %5 = vector.broadcast %4 : vector<1x6xf32> to vector<256x6xf32>
    %6 = arith.addf %3, %5 : vector<256x6xf32>
    %7 = vector.extract_strided_slice %6 {offsets = [0, 0], sizes = [256, 2], strides = [1, 1]} : vector<256x6xf32> to vector<256x2xf32>
    %8 = vector.extract_strided_slice %6 {offsets = [0, 2], sizes = [256, 4], strides = [1, 1]} : vector<256x6xf32> to vector<256x4xf32>
    %c0_6 = arith.constant 0 : index
    %c0_7 = arith.constant 0 : index
    %9 = vector.load %arg7[%c0_6, %c0_7] : memref<256x4xf32, #tpu.memory_space<vmem>>, vector<256x4xf32>
    tpu.vector_store %arg7[%c0_6, %c0_7], %8 {strides = array<i32>} : memref<256x4xf32, #tpu.memory_space<vmem>>, vector<256x4xf32>,
    %c0_8 = arith.constant 0 : index
    %c0_9 = arith.constant 0 : index
    %10 = tpu.strided_load %arg7[%c0_8, %c0_9] {strides = array<i32: 2, 1>} : memref<256x4xf32, #tpu.memory_space<vmem>>, vector<16x4xf32>
    %c1 = arith.constant 1 : index
    %c0_10 = arith.constant 0 : index
    %11 = tpu.strided_load %arg7[%c1, %c0_10] {strides = array<i32: 2, 1>} : memref<256x4xf32, #tpu.memory_space<vmem>>, vector<16x4xf32>
    %12 = arith.maximumf %10, %11 : vector<16x4xf32>
    %13 = vector.extract_strided_slice %12 {offsets = [0, 0], sizes = [8, 4], strides = [1, 1]} : vector<16x4xf32> to vector<8x4xf32>
    %14 = vector.extract_strided_slice %12 {offsets = [8, 0], sizes = [8, 4], strides = [1, 1]} : vector<16x4xf32> to vector<8x4xf32>
    %15 = arith.maximumf %13, %14 : vector<8x4xf32>
    %c0_11 = arith.constant 0 : index
    %c0_12 = arith.constant 0 : index
    %16 = vector.load %arg8[%c0_11, %c0_12] : memref<64x4xf32, #tpu.memory_space<vmem>>, vector<8x4xf32>
    tpu.vector_store %arg8[%c0_11, %c0_12], %15 {strides = array<i32>} : memref<64x4xf32, #tpu.memory_space<vmem>>, vector<8x4xf32>,
    %c32 = arith.constant 32 : index
    %c0_13 = arith.constant 0 : index
    %17 = tpu.strided_load %arg7[%c32, %c0_13] {strides = array<i32: 2, 1>} : memref<256x4xf32, #tpu.memory_space<vmem>>, vector<16x4xf32>
    %c33 = arith.constant 33 : index
    %c0_14 = arith.constant 0 : index
    %18 = tpu.strided_load %arg7[%c33, %c0_14] {strides = array<i32: 2, 1>} : memref<256x4xf32, #tpu.memory_space<vmem>>, vector<16x4xf32>
    %19 = arith.maximumf %17, %18 : vector<16x4xf32>
    %20 = vector.extract_strided_slice %19 {offsets = [0, 0], sizes = [8, 4], strides = [1, 1]} : vector<16x4xf32> to vector<8x4xf32>
    %21 = vector.extract_strided_slice %19 {offsets = [8, 0], sizes = [8, 4], strides = [1, 1]} : vector<16x4xf32> to vector<8x4xf32>
    %22 = arith.maximumf %20, %21 : vector<8x4xf32>
    %c8 = arith.constant 8 : index
    %c0_15 = arith.constant 0 : index
    %23 = vector.load %arg8[%c8, %c0_15] : memref<64x4xf32, #tpu.memory_space<vmem>>, vector<8x4xf32>
    tpu.vector_store %arg8[%c8, %c0_15], %22 {strides = array<i32>} : memref<64x4xf32, #tpu.memory_space<vmem>>, vector<8x4xf32>,
    %c64 = arith.constant 64 : index
    %c0_16 = arith.constant 0 : index
    %24 = tpu.strided_load %arg7[%c64, %c0_16] {strides = array<i32: 2, 1>} : memref<256x4xf32, #tpu.memory_space<vmem>>, vector<16x4xf32>
    %c65 = arith.constant 65 : index
    %c0_17 = arith.constant 0 : index
    %25 = tpu.strided_load %arg7[%c65, %c0_17] {strides = array<i32: 2, 1>} : memref<256x4xf32, #tpu.memory_space<vmem>>, vector<16x4xf32>
    %26 = arith.maximumf %24, %25 : vector<16x4xf32>
    %27 = vector.extract_strided_slice %26 {offsets = [0, 0], sizes = [8, 4], strides = [1, 1]} : vector<16x4xf32> to vector<8x4xf32>
    %28 = vector.extract_strided_slice %26 {offsets = [8, 0], sizes = [8, 4], strides = [1, 1]} : vector<16x4xf32> to vector<8x4xf32>
    %29 = arith.maximumf %27, %28 : vector<8x4xf32>
    %c16 = arith.constant 16 : index
    %c0_18 = arith.constant 0 : index
    %30 = vector.load %arg8[%c16, %c0_18] : memref<64x4xf32, #tpu.memory_space<vmem>>, vector<8x4xf32>
    tpu.vector_store %arg8[%c16, %c0_18], %29 {strides = array<i32>} : memref<64x4xf32, #tpu.memory_space<vmem>>, vector<8x4xf32>,
    %c96 = arith.constant 96 : index
    %c0_19 = arith.constant 0 : index
    %31 = tpu.strided_load %arg7[%c96, %c0_19] {strides = array<i32: 2, 1>} : memref<256x4xf32, #tpu.memory_space<vmem>>, vector<16x4xf32>
    %c97 = arith.constant 97 : index
    %c0_20 = arith.constant 0 : index
    %32 = tpu.strided_load %arg7[%c97, %c0_20] {strides = array<i32: 2, 1>} : memref<256x4xf32, #tpu.memory_space<vmem>>, vector<16x4xf32>
    %33 = arith.maximumf %31, %32 : vector<16x4xf32>
    %34 = vector.extract_strided_slice %33 {offsets = [0, 0], sizes = [8, 4], strides = [1, 1]} : vector<16x4xf32> to vector<8x4xf32>
    %35 = vector.extract_strided_slice %33 {offsets = [8, 0], sizes = [8, 4], strides = [1, 1]} : vector<16x4xf32> to vector<8x4xf32>
    %36 = arith.maximumf %34, %35 : vector<8x4xf32>
    %c24 = arith.constant 24 : index
    %c0_21 = arith.constant 0 : index
    %37 = vector.load %arg8[%c24, %c0_21] : memref<64x4xf32, #tpu.memory_space<vmem>>, vector<8x4xf32>
    tpu.vector_store %arg8[%c24, %c0_21], %36 {strides = array<i32>} : memref<64x4xf32, #tpu.memory_space<vmem>>, vector<8x4xf32>,
    %c128 = arith.constant 128 : index
    %c0_22 = arith.constant 0 : index
    %38 = tpu.strided_load %arg7[%c128, %c0_22] {strides = array<i32: 2, 1>} : memref<256x4xf32, #tpu.memory_space<vmem>>, vector<16x4xf32>
    %c129 = arith.constant 129 : index
    %c0_23 = arith.constant 0 : index
    %39 = tpu.strided_load %arg7[%c129, %c0_23] {strides = array<i32: 2, 1>} : memref<256x4xf32, #tpu.memory_space<vmem>>, vector<16x4xf32>
    %40 = arith.maximumf %38, %39 : vector<16x4xf32>
    %41 = vector.extract_strided_slice %40 {offsets = [0, 0], sizes = [8, 4], strides = [1, 1]} : vector<16x4xf32> to vector<8x4xf32>
    %42 = vector.extract_strided_slice %40 {offsets = [8, 0], sizes = [8, 4], strides = [1, 1]} : vector<16x4xf32> to vector<8x4xf32>
    %43 = arith.maximumf %41, %42 : vector<8x4xf32>
    %c32_24 = arith.constant 32 : index
    %c0_25 = arith.constant 0 : index
    %44 = vector.load %arg8[%c32_24, %c0_25] : memref<64x4xf32, #tpu.memory_space<vmem>>, vector<8x4xf32>
    tpu.vector_store %arg8[%c32_24, %c0_25], %43 {strides = array<i32>} : memref<64x4xf32, #tpu.memory_space<vmem>>, vector<8x4xf32>,
    %c160 = arith.constant 160 : index
    %c0_26 = arith.constant 0 : index
    %45 = tpu.strided_load %arg7[%c160, %c0_26] {strides = array<i32: 2, 1>} : memref<256x4xf32, #tpu.memory_space<vmem>>, vector<16x4xf32>
    %c161 = arith.constant 161 : index
    %c0_27 = arith.constant 0 : index
    %46 = tpu.strided_load %arg7[%c161, %c0_27] {strides = array<i32: 2, 1>} : memref<256x4xf32, #tpu.memory_space<vmem>>, vector<16x4xf32>
    %47 = arith.maximumf %45, %46 : vector<16x4xf32>
    %48 = vector.extract_strided_slice %47 {offsets = [0, 0], sizes = [8, 4], strides = [1, 1]} : vector<16x4xf32> to vector<8x4xf32>
    %49 = vector.extract_strided_slice %47 {offsets = [8, 0], sizes = [8, 4], strides = [1, 1]} : vector<16x4xf32> to vector<8x4xf32>
    %50 = arith.maximumf %48, %49 : vector<8x4xf32>
    %c40 = arith.constant 40 : index
    %c0_28 = arith.constant 0 : index
    %51 = vector.load %arg8[%c40, %c0_28] : memref<64x4xf32, #tpu.memory_space<vmem>>, vector<8x4xf32>
    tpu.vector_store %arg8[%c40, %c0_28], %50 {strides = array<i32>} : memref<64x4xf32, #tpu.memory_space<vmem>>, vector<8x4xf32>,
    %c192 = arith.constant 192 : index
    %c0_29 = arith.constant 0 : index
    %52 = tpu.strided_load %arg7[%c192, %c0_29] {strides = array<i32: 2, 1>} : memref<256x4xf32, #tpu.memory_space<vmem>>, vector<16x4xf32>
    %c193 = arith.constant 193 : index
    %c0_30 = arith.constant 0 : index
    %53 = tpu.strided_load %arg7[%c193, %c0_30] {strides = array<i32: 2, 1>} : memref<256x4xf32, #tpu.memory_space<vmem>>, vector<16x4xf32>
    %54 = arith.maximumf %52, %53 : vector<16x4xf32>
    %55 = vector.extract_strided_slice %54 {offsets = [0, 0], sizes = [8, 4], strides = [1, 1]} : vector<16x4xf32> to vector<8x4xf32>
    %56 = vector.extract_strided_slice %54 {offsets = [8, 0], sizes = [8, 4], strides = [1, 1]} : vector<16x4xf32> to vector<8x4xf32>
    %57 = arith.maximumf %55, %56 : vector<8x4xf32>
    %c48 = arith.constant 48 : index
    %c0_31 = arith.constant 0 : index
    %58 = vector.load %arg8[%c48, %c0_31] : memref<64x4xf32, #tpu.memory_space<vmem>>, vector<8x4xf32>
    tpu.vector_store %arg8[%c48, %c0_31], %57 {strides = array<i32>} : memref<64x4xf32, #tpu.memory_space<vmem>>, vector<8x4xf32>,
    %c224 = arith.constant 224 : index
    %c0_32 = arith.constant 0 : index
    %59 = tpu.strided_load %arg7[%c224, %c0_32] {strides = array<i32: 2, 1>} : memref<256x4xf32, #tpu.memory_space<vmem>>, vector<16x4xf32>
    %c225 = arith.constant 225 : index
    %c0_33 = arith.constant 0 : index
    %60 = tpu.strided_load %arg7[%c225, %c0_33] {strides = array<i32: 2, 1>} : memref<256x4xf32, #tpu.memory_space<vmem>>, vector<16x4xf32>
    %61 = arith.maximumf %59, %60 : vector<16x4xf32>
    %62 = vector.extract_strided_slice %61 {offsets = [0, 0], sizes = [8, 4], strides = [1, 1]} : vector<16x4xf32> to vector<8x4xf32>
    %63 = vector.extract_strided_slice %61 {offsets = [8, 0], sizes = [8, 4], strides = [1, 1]} : vector<16x4xf32> to vector<8x4xf32>
    %64 = arith.maximumf %62, %63 : vector<8x4xf32>
    %c56 = arith.constant 56 : index
    %c0_34 = arith.constant 0 : index
    %65 = vector.load %arg8[%c56, %c0_34] : memref<64x4xf32, #tpu.memory_space<vmem>>, vector<8x4xf32>
    tpu.vector_store %arg8[%c56, %c0_34], %64 {strides = array<i32>} : memref<64x4xf32, #tpu.memory_space<vmem>>, vector<8x4xf32>,
    %c0_35 = arith.constant 0 : index
    %c0_36 = arith.constant 0 : index
    %66 = vector.load %arg8[%c0_35, %c0_36] : memref<64x4xf32, #tpu.memory_space<vmem>>, vector<64x4xf32>
    %67 = vector.extract_strided_slice %66 {offsets = [0, 0], sizes = [64, 2], strides = [1, 1]} : vector<64x4xf32> to vector<64x2xf32>
    %68 = vector.extract_strided_slice %66 {offsets = [0, 2], sizes = [64, 2], strides = [1, 1]} : vector<64x4xf32> to vector<64x2xf32>
    %cst_37 = arith.constant dense<0.000000e+00> : vector<256x64xf32>
    %69 = tpu.matmul %7, %67, %cst_37 {dimension_numbers = #tpu.dot_dimension_numbers<[1], [1], [0], [0], [0, 0, 1, 0], [], []>} : vector<256x2xf32>, vector<64x2xf32>, vector<256x64xf32> -> vector<256x64xf32>
    %cst_38 = arith.constant dense<0xFF800000> : vector<256xf32>
    %70 = vector.multi_reduction <maximumf>, %69, %cst_38 [1] : vector<256x64xf32> to vector<256xf32>
    %71 = vector.shape_cast %70 : vector<256xf32> to vector<256x1xf32>
    %72 = vector.broadcast %71 : vector<256x1xf32> to vector<256x64xf32>
    %73 = arith.subf %69, %72 : vector<256x64xf32>
    %74 = math.exp %73 : vector<256x64xf32>
    %cst_39 = arith.constant dense<0.000000e+00> : vector<256xf32>
    %75 = vector.multi_reduction <add>, %74, %cst_39 [1] : vector<256x64xf32> to vector<256xf32>
    %76 = vector.shape_cast %75 : vector<256xf32> to vector<256x1xf32>
    %77 = tpu.reciprocal %76 {approx = true} : vector<256x1xf32> -> vector<256x1xf32>
    %78 = vector.broadcast %77 : vector<256x1xf32> to vector<256x64xf32>
    %79 = arith.mulf %74, %78 : vector<256x64xf32>
    %cst_40 = arith.constant dense<0.000000e+00> : vector<256x2xf32>
    %80 = tpu.matmul %79, %68, %cst_40 {dimension_numbers = #tpu.dot_dimension_numbers<[1], [0], [0], [1], [0, 0, 1, 1], [], []>} : vector<256x64xf32>, vector<64x2xf32>, vector<256x2xf32> -> vector<256x2xf32>
    %c0_41 = arith.constant 0 : index
    %c0_42 = arith.constant 0 : index
    %81 = vector.load %arg4[%c0_41, %c0_42] : memref<4x2xf32, #tpu.memory_space<vmem>>, vector<4x2xf32>
    %cst_43 = arith.constant dense<0.000000e+00> : vector<4x256xf32>
    %82 = tpu.matmul %81, %80, %cst_43 {dimension_numbers = #tpu.dot_dimension_numbers<[1], [1], [0], [0], [0, 0, 1, 0], [], []>} : vector<4x2xf32>, vector<256x2xf32>, vector<4x256xf32> -> vector<4x256xf32>
    %c0_44 = arith.constant 0 : index
    %c0_45 = arith.constant 0 : index
    %83 = vector.load %arg5[%c0_44, %c0_45] : memref<4x1xf32, #tpu.memory_space<vmem>>, vector<4x1xf32>
    %84 = vector.broadcast %83 : vector<4x1xf32> to vector<4x256xf32>
    %85 = arith.addf %82, %84 : vector<4x256xf32>
    %86 = arith.addf %85, %1 : vector<4x256xf32>
    %c0_46 = arith.constant 0 : index
    %c0_47 = arith.constant 0 : index
    %c0_48 = arith.constant 0 : index
    %87 = vector.load %arg6[%c0_46, %c0_47, %c0_48] : memref<1x4x256xf32, #tpu.memory_space<vmem>>, vector<1x4x256xf32>
    %88 = vector.shape_cast %87 : vector<1x4x256xf32> to vector<4x256xf32>
    %89 = vector.shape_cast %86 : vector<4x256xf32> to vector<1x4x256xf32>
    tpu.vector_store %arg6[%c0_46, %c0_47, %c0_48], %89 {strides = array<i32>} : memref<1x4x256xf32, #tpu.memory_space<vmem>>, vector<1x4x256xf32>,
    return
  }
  func.func @transform_0(%arg0: i32) -> (i32, i32, i32) {
    %c0_i32 = arith.constant 0 : i32
    %c0_i32_0 = arith.constant 0 : i32
    %c0_i32_1 = arith.constant 0 : i32
    return %arg0, %c0_i32, %c0_i32_0 : i32, i32, i32
  }
  func.func @transform_1(%arg0: i32) -> (i32, i32) {
    %c0_i32 = arith.constant 0 : i32
    %c0_i32_0 = arith.constant 0 : i32
    %c0_i32_1 = arith.constant 0 : i32
    return %c0_i32, %c0_i32_0 : i32, i32
  }
  func.func @transform_2(%arg0: i32) -> (i32, i32) {
    %c0_i32 = arith.constant 0 : i32
    %c0_i32_0 = arith.constant 0 : i32
    %c0_i32_1 = arith.constant 0 : i32
    return %c0_i32, %c0_i32_0 : i32, i32
  }
  func.func @transform_3(%arg0: i32) -> (i32, i32) {
    %c0_i32 = arith.constant 0 : i32
    %c0_i32_0 = arith.constant 0 : i32
    %c0_i32_1 = arith.constant 0 : i32
    return %c0_i32, %c0_i32_0 : i32, i32
  }
  func.func @transform_4(%arg0: i32) -> (i32, i32) {
    %c0_i32 = arith.constant 0 : i32
    %c0_i32_0 = arith.constant 0 : i32
    %c0_i32_1 = arith.constant 0 : i32
    return %c0_i32, %c0_i32_0 : i32, i32
  }
  func.func @transform_5(%arg0: i32) -> (i32, i32, i32) {
    %c0_i32 = arith.constant 0 : i32
    %c0_i32_0 = arith.constant 0 : i32
    %c0_i32_1 = arith.constant 0 : i32
    return %arg0, %c0_i32, %c0_i32_0 : i32, i32, i32
  }
}

</mosaic_0001>

<llo_original>
// kernel: non_local_block.1
$region0: #{non_local_block.1}
  #allocation0 [shape = 'u32[]', space=smem, size = 0x4, offset = 0x4, fixed_abs, tag = 'smem constant byte address 0x4 - core index']
  #allocation1 [shape = 'u32[144,128]{1,0:T(1,128)}', space=vmem, size = 0x12000, scoped, tag = 'internal scratch']
  #allocation2 [shape = 'f32[256,4]{1,0:T(8,128)}', space=vmem, size = 0x20000, scoped, tag = 'scratch operand']
  #allocation3 [shape = 'f32[64,4]{1,0:T(8,128)}', space=vmem, size = 0x8000, scoped, tag = 'scratch operand']
  %s0 = inlined_call_operand.vmem [shape: f32[2,4,256], index: 0, kind: input, shape index: {}, may-alias: {0,5}]
  %s1 = inlined_call_operand.vmem [shape: f32[4,6], index: 1, kind: input, shape index: {}]
  %s2 = inlined_call_operand.vmem [shape: f32[1,6], index: 2, kind: input, shape index: {}]
  %s3 = inlined_call_operand.vmem [shape: f32[4,2], index: 3, kind: input, shape index: {}]
  %s4 = inlined_call_operand.vmem [shape: f32[4,1], index: 4, kind: input, shape index: {}]
  %s5 = inlined_call_operand.vmem [shape: f32[2,4,256], index: 5, kind: output, shape index: {}, may-alias: {0,5}]
  %s6 = sld [smem:[#allocation0]]
  $region53: #{non_local_block.1} parent=0
    _
  %s8 = ssub.s32 1, %s6
  %s9 = scalar_select 0, %s8, %s6
  loop: start=0, step=1, limit=4
  $region2: #{non_local_block.1} parent=0 // loop_pre_header
    _
  $region3: #{non_local_block.1} parent=0 // loop_header
    %s11 = sphi 0, %s15
    %p12 = scmp.ge.s32.totalorder %s11, 4
    %s21 = sphi 0, %s23
    %s24 = sphi 0, %s21
    %s25 = sphi 0, %s24
    %s41 = sphi 0, %s25
    %s45 = sphi 0, %s45
    %s47 = sphi 0, %s45
    %s48 = sphi 0, %s47
    %s62 = sphi 0, %s48
    %s66 = sphi 0, %s66
    %s68 = sphi 0, %s66
    %s69 = sphi 0, %s68
    %s83 = sphi 0, %s69
    %s87 = sphi 0, %s87
    %s89 = sphi 0, %s87
    %s90 = sphi 0, %s89
    %s104 = sphi 0, %s90
    %s108 = sphi 0, %s108
    %s110 = sphi 0, %s108
    %s111 = sphi 0, %s110
    %s125 = sphi 0, %s111
    %s131 = sphi 0, %s133
    %s134 = sphi 0, %s131
    %s135 = sphi 0, %s134
    %s151 = sphi 0, %s135
  $region4: #{non_local_block.1} parent=0 // loop_header_branch
    %14 = sbr.rel (%p12) target = $region8
  $region5: #{non_local_block.1} parent=0 // loop_body
    %s16 = ssub.s32 %s11, 1
    %s17 = ssub.s32 %s11, 2
    %s18 = sadd.s32 %s11, 1
    %s19 = ssub.s32 %s11, %s18
    %p20 = scmp.eq.s32.totalorder %s19, 0
    %s22 = sadd.s32 %s21, 1
    %s23 = scalar_select %p20, %s21, %s22
    %p26 = pneg %p20
    %p27 = scmp.eq.s32.totalorder %s11, 1
    %p28 = por %p26, %p27
    %p29 = scmp.ne.s32.totalorder %s21, %s24
    %p30 = scmp.eq.s32.totalorder %s11, 0
    %p31 = por %p29, %p30
    %p32 = scmp.ne.s32.totalorder %s21, %s24
    %p33 = scmp.eq.s32.totalorder %s16, 1
    %p34 = por %p32, %p33
    %p35 = scmp.ne.s32.totalorder %s24, %s25
    %p36 = scmp.eq.s32.totalorder %s16, 0
    %p37 = por %p35, %p36
    %p38 = scmp.ne.s32.totalorder %s24, %s25
    %p39 = scmp.eq.s32.totalorder %s17, 1
    %p40 = por %p38, %p39
    %p42 = scmp.ne.s32.totalorder %s25, %s41
    %p43 = scmp.eq.s32.totalorder %s17, 0
    %p44 = por %p42, %p43
    %s46 = sadd.s32 %s45, 1
    %p49 = scmp.eq.s32.totalorder %s11, 1
    %p50 = scmp.ne.s32.totalorder %s45, %s47
    %p51 = scmp.eq.s32.totalorder %s11, 0
    %p52 = por %p50, %p51
    %p53 = scmp.ne.s32.totalorder %s45, %s47
    %p54 = scmp.eq.s32.totalorder %s16, 1
    %p55 = por %p53, %p54
    %p56 = scmp.ne.s32.totalorder %s47, %s48
    %p57 = scmp.eq.s32.totalorder %s16, 0
    %p58 = por %p56, %p57
    %p59 = scmp.ne.s32.totalorder %s47, %s48
    %p60 = scmp.eq.s32.totalorder %s17, 1
    %p61 = por %p59, %p60
    %p63 = scmp.ne.s32.totalorder %s48, %s62
    %p64 = scmp.eq.s32.totalorder %s17, 0
    %p65 = por %p63, %p64
    %s67 = sadd.s32 %s66, 1
    %p70 = scmp.eq.s32.totalorder %s11, 1
    %p71 = scmp.ne.s32.totalorder %s66, %s68
    %p72 = scmp.eq.s32.totalorder %s11, 0
    %p73 = por %p71, %p72
    %p74 = scmp.ne.s32.totalorder %s66, %s68
    %p75 = scmp.eq.s32.totalorder %s16, 1
    %p76 = por %p74, %p75
    %p77 = scmp.ne.s32.totalorder %s68, %s69
    %p78 = scmp.eq.s32.totalorder %s16, 0
    %p79 = por %p77, %p78
    %p80 = scmp.ne.s32.totalorder %s68, %s69
    %p81 = scmp.eq.s32.totalorder %s17, 1
    %p82 = por %p80, %p81
    %p84 = scmp.ne.s32.totalorder %s69, %s83
    %p85 = scmp.eq.s32.totalorder %s17, 0
    %p86 = por %p84, %p85
    %s88 = sadd.s32 %s87, 1
    %p91 = scmp.eq.s32.totalorder %s11, 1
    %p92 = scmp.ne.s32.totalorder %s87, %s89
    %p93 = scmp.eq.s32.totalorder %s11, 0
    %p94 = por %p92, %p93
    %p95 = scmp.ne.s32.totalorder %s87, %s89
    %p96 = scmp.eq.s32.totalorder %s16, 1
    %p97 = por %p95, %p96
    %p98 = scmp.ne.s32.totalorder %s89, %s90
    %p99 = scmp.eq.s32.totalorder %s16, 0
    %p100 = por %p98, %p99
    %p101 = scmp.ne.s32.totalorder %s89, %s90
    %p102 = scmp.eq.s32.totalorder %s17, 1
    %p103 = por %p101, %p102
    %p105 = scmp.ne.s32.totalorder %s90, %s104
    %p106 = scmp.eq.s32.totalorder %s17, 0
    %p107 = por %p105, %p106
    %s109 = sadd.s32 %s108, 1
    %p112 = scmp.eq.s32.totalorder %s11, 1
    %p113 = scmp.ne.s32.totalorder %s108, %s110
    %p114 = scmp.eq.s32.totalorder %s11, 0
    %p115 = por %p113, %p114
    %p116 = scmp.ne.s32.totalorder %s108, %s110
    %p117 = scmp.eq.s32.totalorder %s16, 1
    %p118 = por %p116, %p117
    %p119 = scmp.ne.s32.totalorder %s110, %s111
    %p120 = scmp.eq.s32.totalorder %s16, 0
    %p121 = por %p119, %p120
    %p122 = scmp.ne.s32.totalorder %s110, %s111
    %p123 = scmp.eq.s32.totalorder %s17, 1
    %p124 = por %p122, %p123
    %p126 = scmp.ne.s32.totalorder %s111, %s125
    %p127 = scmp.eq.s32.totalorder %s17, 0
    %p128 = por %p126, %p127
    %s129 = ssub.s32 %s11, %s18
    %p130 = scmp.eq.s32.totalorder %s129, 0
    %s132 = sadd.s32 %s131, 1
    %s133 = scalar_select %p130, %s131, %s132
    %p136 = pneg %p130
    %p137 = scmp.eq.s32.totalorder %s11, 1
    %p138 = por %p136, %p137
    %p139 = scmp.ne.s32.totalorder %s131, %s134
    %p140 = scmp.eq.s32.totalorder %s11, 0
    %p141 = por %p139, %p140
    %p142 = scmp.ne.s32.totalorder %s131, %s134
    %p143 = scmp.eq.s32.totalorder %s16, 1
    %p144 = por %p142, %p143
    %p145 = scmp.ne.s32.totalorder %s134, %s135
    %p146 = scmp.eq.s32.totalorder %s16, 0
    %p147 = por %p145, %p146
    %p148 = scmp.ne.s32.totalorder %s134, %s135
    %p149 = scmp.eq.s32.totalorder %s17, 1
    %p150 = por %p148, %p149
    %p152 = scmp.ne.s32.totalorder %s135, %s151
    %p153 = scmp.eq.s32.totalorder %s17, 0
    %p154 = por %p152, %p153
    %p155 = scmp.le.s32.totalorder 1, %s11
    %p156 = scmp.lt.s32.totalorder %s11, 3
    %p157 = pnand %p155, %p156
    %p158 = pneg %p157
    // Predicated region
    $region9: #{non_local_block.1} parent=5 // pred_check
      _
    $region10: #{non_local_block.1} parent=5 // pred_check_branch
      %160 = sbr.rel (%p157) target = $region12
    $region11: #{non_local_block.1} parent=5 // pred_region
      %s161 = ssub.s32 %s11, 1
      // Predicated region
      $region13: #{non_local_block.1} parent=11 // pred_check
        %p162 = pneg %p58
      $region14: #{non_local_block.1} parent=11 // pred_check_branch
        %164 = sbr.rel (%p162) target = $region16
      $region15: #{non_local_block.1} parent=11 // pred_region
        _
      $region16: #{non_local_block.1} parent=11 // pred_fallthru
        _
      // Predicated region
      $region17: #{non_local_block.1} parent=11 // pred_check
        %p165 = pneg %p79
      $region18: #{non_local_block.1} parent=11 // pred_check_branch
        %167 = sbr.rel (%p165) target = $region20
      $region19: #{non_local_block.1} parent=11 // pred_region
        _
      $region20: #{non_local_block.1} parent=11 // pred_fallthru
        _
      // Predicated region
      $region21: #{non_local_block.1} parent=11 // pred_check
        %p168 = pneg %p100
      $region22: #{non_local_block.1} parent=11 // pred_check_branch
        %170 = sbr.rel (%p168) target = $region24
      $region23: #{non_local_block.1} parent=11 // pred_region
        _
      $region24: #{non_local_block.1} parent=11 // pred_fallthru
        _
      // Predicated region
      $region25: #{non_local_block.1} parent=11 // pred_check
        %p171 = pneg %p121
      $region26: #{non_local_block.1} parent=11 // pred_check_branch
        %173 = sbr.rel (%p171) target = $region28
      $region27: #{non_local_block.1} parent=11 // pred_region
        _
      $region28: #{non_local_block.1} parent=11 // pred_fallthru
        _
    $region12: #{non_local_block.1} parent=5 // pred_fallthru
      _
    %p174 = scmp.lt.s32.totalorder %s11, 2
    // Predicated region
    $region29: #{non_local_block.1} parent=5 // pred_check
      %p175 = pneg %p174
    $region30: #{non_local_block.1} parent=5 // pred_check_branch
      %177 = sbr.rel (%p175) target = $region32
    $region31: #{non_local_block.1} parent=5 // pred_region
      // Predicated region
      $region33: #{non_local_block.1} parent=31 // pred_check
        %p178 = pneg %p31
      $region34: #{non_local_block.1} parent=31 // pred_check_branch
        %180 = sbr.rel (%p178) target = $region36
      $region35: #{non_local_block.1} parent=31 // pred_region
        %p181 = scmp.lt.s32.totalorder %s11, 1
        %s182 = scalar_select %p181, %s11, 1
        %s183 = smul.addr %s182, 2
        %s184 = smul.addr %s183, 4
        %s185 = scalar_lea.vmem %s0, %s184
      $region36: #{non_local_block.1} parent=31 // pred_fallthru
        _
    $region32: #{non_local_block.1} parent=5 // pred_fallthru
      _
    %p186 = scmp.le.s32.totalorder 1, %s11
    %p187 = scmp.lt.s32.totalorder %s11, 3
    %p188 = pnand %p186, %p187
    %p189 = pneg %p188
    // Predicated region
    $region37: #{non_local_block.1} parent=5 // pred_check
      _
    $region38: #{non_local_block.1} parent=5 // pred_check_branch
      %191 = sbr.rel (%p188) target = $region40
    $region39: #{non_local_block.1} parent=5 // pred_region
      %s192 = ssub.s32 %s11, 1
      %p193 = scmp.lt.s32.totalorder %s16, 1
      %s194 = scalar_select %p193, %s16, 1
      %s195 = smul.addr %s194, 2
      %s196 = smul.addr %s195, 4
      %s197 = scalar_lea.vmem %s0, %s196
      %p198 = pneg %p37
      %p199 = pneg %p34
      %p200 = pneg %p58
      %p201 = pneg %p55
      %p202 = pneg %p79
      %p203 = pneg %p76
      %p204 = pneg %p100
      %p205 = pneg %p97
      %p206 = pneg %p121
      %p207 = pneg %p118
      %p208 = pneg %p147
      %p209 = pneg %p144
      %p210 = scmp.lt.s32.totalorder %s16, 1
      %s211 = scalar_select %p210, %s16, 1
      %s212 = smul.addr %s211, 2
      %s213 = smul.addr %s212, 4
      %s214 = scalar_lea.vmem %s5, %s213
      %p215 = scmp.lt.s32.totalorder %s16, 1
      %s216 = scalar_select %p215, %s16, 1
      %s217 = smul.addr %s216, 2
      %s218 = smul.addr %s217, 4
      %s219 = scalar_lea.vmem %s0, %s218
      %p220 = scmp.lt.s32.totalorder %s16, 1
      %s221 = scalar_select %p220, %s16, 1
      %s222 = smul.addr %s221, 2
      %s223 = smul.addr %s222, 4
      %s224 = scalar_lea.vmem %s5, %s223
      %v225 = vld [vmem:[%s219] sm:$0xff]
      %v226 = vld [vmem:[%s1] sm:$0xf]
      %v227 = vld [vmem:[%s2] sm:$0x1]
      %v229 = vlaneseq
      %v230 = vshrl.u32 %v229, 7
      %v231 = vsub.s32 0, %v230
      %v232 = vrot.slane %v227, %v231
      %v235 = vcombine.high %v225, %v225
      %237 = vxpose.xlu0.b32.start [1/16] %v225, 128
      %238 = vxpose.xlu0.b32.cont [2/16] 0.0, 128
      %239 = vxpose.xlu0.b32.cont [3/16] 0.0, 128
      %240 = vxpose.xlu0.b32.cont [4/16] 0.0, 128
      %241 = vxpose.xlu0.b32.cont [5/16] 0.0, 128
      %242 = vxpose.xlu0.b32.cont [6/16] 0.0, 128
      %243 = vxpose.xlu0.b32.cont [7/16] 0.0, 128
      %244 = vxpose.xlu0.b32.cont [8/16] 0.0, 128
      %245 = vxpose.xlu0.b32.cont [9/16] 0.0, 128
      %246 = vxpose.xlu0.b32.cont [10/16] 0.0, 128
      %247 = vxpose.xlu0.b32.cont [11/16] 0.0, 128
      %248 = vxpose.xlu0.b32.cont [12/16] 0.0, 128
      %249 = vxpose.xlu0.b32.cont [13/16] 0.0, 128
      %250 = vxpose.xlu0.b32.cont [14/16] 0.0, 128
      %251 = vxpose.xlu0.b32.cont [15/16] 0.0, 128
      %252 = vxpose.xlu0.b32.end [16/16] 0.0, 128
      %v253 = vpop.trf.xlu0
      %v254 = vpop.trf.xlu0
      %v255 = vpop.trf.xlu0
      %v256 = vpop.trf.xlu0
      %v257 = vpop.trf.xlu0
      %v258 = vpop.trf.xlu0
      %v259 = vpop.trf.xlu0
      %v260 = vpop.trf.xlu0
      %v261 = vpop.trf.xlu0
      %v262 = vpop.trf.xlu0
      %v263 = vpop.trf.xlu0
      %v264 = vpop.trf.xlu0
      %v265 = vpop.trf.xlu0
      %v266 = vpop.trf.xlu0
      %v267 = vpop.trf.xlu0
      %v268 = vpop.trf.xlu0
      %269 = vxpose.xlu0.b32.start [1/16] %v235, 128
      %270 = vxpose.xlu0.b32.cont [2/16] 0.0, 128
      %271 = vxpose.xlu0.b32.cont [3/16] 0.0, 128
      %272 = vxpose.xlu0.b32.cont [4/16] 0.0, 128
      %273 = vxpose.xlu0.b32.cont [5/16] 0.0, 128
      %274 = vxpose.xlu0.b32.cont [6/16] 0.0, 128
      %275 = vxpose.xlu0.b32.cont [7/16] 0.0, 128
      %276 = vxpose.xlu0.b32.cont [8/16] 0.0, 128
      %277 = vxpose.xlu0.b32.cont [9/16] 0.0, 128
      %278 = vxpose.xlu0.b32.cont [10/16] 0.0, 128
      %279 = vxpose.xlu0.b32.cont [11/16] 0.0, 128
      %280 = vxpose.xlu0.b32.cont [12/16] 0.0, 128
      %281 = vxpose.xlu0.b32.cont [13/16] 0.0, 128
      %282 = vxpose.xlu0.b32.cont [14/16] 0.0, 128
      %283 = vxpose.xlu0.b32.cont [15/16] 0.0, 128
      %284 = vxpose.xlu0.b32.end [16/16] 0.0, 128
      %v285 = vpop.trf.xlu0
      %v286 = vpop.trf.xlu0
      %v287 = vpop.trf.xlu0
      %v288 = vpop.trf.xlu0
      %v289 = vpop.trf.xlu0
      %v290 = vpop.trf.xlu0
      %v291 = vpop.trf.xlu0
      %v292 = vpop.trf.xlu0
      %v293 = vpop.trf.xlu0
      %v294 = vpop.trf.xlu0
      %v295 = vpop.trf.xlu0
      %v296 = vpop.trf.xlu0
      %v297 = vpop.trf.xlu0
      %v298 = vpop.trf.xlu0
      %v299 = vpop.trf.xlu0
      %v300 = vpop.trf.xlu0
      %vm301 = vcmask 31744
      %v303 = vsel %vm301, %v253, 0
      %v306 = vsel %vm301, %v254, 0
      %v309 = vsel %vm301, %v255, 0
      %v312 = vsel %vm301, %v256, 0
      %v315 = vsel %vm301, %v257, 0
      %v318 = vsel %vm301, %v258, 0
      %v321 = vsel %vm301, %v259, 0
      %v324 = vsel %vm301, %v260, 0
      %v327 = vsel %vm301, %v261, 0
      %v330 = vsel %vm301, %v262, 0
      %v333 = vsel %vm301, %v263, 0
      %v336 = vsel %vm301, %v264, 0
      %v339 = vsel %vm301, %v265, 0
      %v342 = vsel %vm301, %v266, 0
      %v345 = vsel %vm301, %v267, 0
      %v348 = vsel %vm301, %v268, 0
      %v351 = vsel %vm301, %v285, 0
      %v354 = vsel %vm301, %v286, 0
      %v357 = vsel %vm301, %v287, 0
      %v360 = vsel %vm301, %v288, 0
      %v363 = vsel %vm301, %v289, 0
      %v366 = vsel %vm301, %v290, 0
      %v369 = vsel %vm301, %v291, 0
      %v372 = vsel %vm301, %v292, 0
      %v375 = vsel %vm301, %v293, 0
      %v378 = vsel %vm301, %v294, 0
      %v381 = vsel %vm301, %v295, 0
      %v384 = vsel %vm301, %v296, 0
      %v387 = vsel %vm301, %v297, 0
      %v390 = vsel %vm301, %v298, 0
      %v393 = vsel %vm301, %v299, 0
      %v396 = vsel %vm301, %v300, 0
      %vm398 = vcmask 1043456
      %v400 = vsel %vm398, %v226, 0
      %402 = vmatprep.subr.mxu0 0.0
      %403 = vmatpush1.msra.mxu0 %v400
      %404 = vmatprep.subr.mxu0 0.0
      %405 = vmatpush1.msra.mxu0 0.0
      %406 = vmatprep.subr.mxu0 0.0
      %407 = vmatpush1.msra.mxu0 0.0
      %408 = vmatprep.subr.mxu0 0.0
      %409 = vmatpush1.msra.mxu0 0.0
      %410 = vmatprep.subr.mxu0 0.0
      %411 = vmatpush1.msra.mxu0 0.0
      %412 = vmatprep.subr.mxu0 0.0
      %413 = vmatpush1.msra.mxu0 0.0
      %414 = vmatprep.subr.mxu0 0.0
      %415 = vmatpush1.msra.mxu0 0.0
      %416 = vmatprep.subr.mxu0 0.0
      %417 = vmatpush1.msra.mxu0 0.0
      %418 = vmatprep.subr.mxu0 0.0
      %419 = vmatpush1.msra.mxu0 0.0
      %420 = vmatprep.subr.mxu0 0.0
      %421 = vmatpush1.msra.mxu0 0.0
      %422 = vmatprep.subr.mxu0 0.0
      %423 = vmatpush1.msra.mxu0 0.0
      %424 = vmatprep.subr.mxu0 0.0
      %425 = vmatpush1.msra.mxu0 0.0
      %426 = vmatprep.subr.mxu0 0.0
      %427 = vmatpush1.msra.mxu0 0.0
      %428 = vmatprep.subr.mxu0 0.0
      %429 = vmatpush1.msra.mxu0 0.0
      %430 = vmatprep.subr.mxu0 0.0
      %431 = vmatpush1.msra.mxu0 0.0
      %432 = vmatprep.subr.mxu0 0.0
      %433 = vmatpush1.msra.mxu0 0.0
      %434 = vmatprep.subr.mxu0 0.0
      %435 = vmatpush1.msra.mxu0 0.0
      %436 = vmatprep.subr.mxu0 0.0
      %437 = vmatpush1.msra.mxu0 0.0
      %438 = vmatprep.subr.mxu0 0.0
      %439 = vmatpush1.msra.mxu0 0.0
      %440 = vmatprep.subr.mxu0 0.0
      %441 = vmatpush1.msra.mxu0 0.0
      %442 = vmatprep.subr.mxu0 0.0
      %443 = vmatpush1.msra.mxu0 0.0
      %444 = vmatprep.subr.mxu0 0.0
      %445 = vmatpush1.msra.mxu0 0.0
      %446 = vmatprep.subr.mxu0 0.0
      %447 = vmatpush1.msra.mxu0 0.0
      %448 = vmatprep.subr.mxu0 0.0
      %449 = vmatpush1.msra.mxu0 0.0
      %450 = vmatprep.subr.mxu0 0.0
      %451 = vmatpush1.msra.mxu0 0.0
      %452 = vmatprep.subr.mxu0 0.0
      %453 = vmatpush1.msra.mxu0 0.0
      %454 = vmatprep.subr.mxu0 0.0
      %455 = vmatpush1.msra.mxu0 0.0
      %456 = vmatprep.subr.mxu0 0.0
      %457 = vmatpush1.msra.mxu0 0.0
      %458 = vmatprep.subr.mxu0 0.0
      %459 = vmatpush1.msra.mxu0 0.0
      %460 = vmatprep.subr.mxu0 0.0
      %461 = vmatpush1.msra.mxu0 0.0
      %462 = vmatprep.subr.mxu0 0.0
      %463 = vmatpush1.msra.mxu0 0.0
      %464 = vmatprep.subr.mxu0 0.0
      %465 = vmatpush1.msra.mxu0 0.0
      %466 = vmatprep.mubr.f32.mxu0 0.0
      %467 = vmatmul.mubr.f32.gmra.mrb[0].mxu0 %v303
      %v468 = vpop.f32.mrb[0].mxu0
      %v469 = vadd.f32 %v232, %v468
      %v470 = vpop.f32.mrb[0].mxu0
      %471 = vmatprep.mubr.f32.mxu0 0.0
      %472 = vmatmul.mubr.f32.gmra.mrb[0].mxu0 %v306
      %v473 = vpop.f32.mrb[0].mxu0
      %v474 = vadd.f32 %v232, %v473
      %v475 = vpop.f32.mrb[0].mxu0
      %476 = vmatprep.mubr.f32.mxu0 0.0
      %477 = vmatmul.mubr.f32.gmra.mrb[0].mxu0 %v309
      %v478 = vpop.f32.mrb[0].mxu0
      %v479 = vadd.f32 %v232, %v478
      %v480 = vpop.f32.mrb[0].mxu0
      %481 = vmatprep.mubr.f32.mxu0 0.0
      %482 = vmatmul.mubr.f32.gmra.mrb[0].mxu0 %v312
      %v483 = vpop.f32.mrb[0].mxu0
      %v484 = vadd.f32 %v232, %v483
      %v485 = vpop.f32.mrb[0].mxu0
      %486 = vmatprep.mubr.f32.mxu0 0.0
      %487 = vmatmul.mubr.f32.gmra.mrb[0].mxu0 %v315
      %v488 = vpop.f32.mrb[0].mxu0
      %v489 = vadd.f32 %v232, %v488
      %v490 = vpop.f32.mrb[0].mxu0
      %491 = vmatprep.mubr.f32.mxu0 0.0
      %492 = vmatmul.mubr.f32.gmra.mrb[0].mxu0 %v318
      %v493 = vpop.f32.mrb[0].mxu0
      %v494 = vadd.f32 %v232, %v493
      %v495 = vpop.f32.mrb[0].mxu0
      %496 = vmatprep.mubr.f32.mxu0 0.0
      %497 = vmatmul.mubr.f32.gmra.mrb[0].mxu0 %v321
      %v498 = vpop.f32.mrb[0].mxu0
      %v499 = vadd.f32 %v232, %v498
      %v500 = vpop.f32.mrb[0].mxu0
      %501 = vmatprep.mubr.f32.mxu0 0.0
      %502 = vmatmul.mubr.f32.gmra.mrb[0].mxu0 %v324
      %v503 = vpop.f32.mrb[0].mxu0
      %v504 = vadd.f32 %v232, %v503
      %v505 = vpop.f32.mrb[0].mxu0
      %506 = vmatprep.mubr.f32.mxu0 0.0
      %507 = vmatmul.mubr.f32.gmra.mrb[0].mxu0 %v327
      %v508 = vpop.f32.mrb[0].mxu0
      %v509 = vadd.f32 %v232, %v508
      %v510 = vpop.f32.mrb[0].mxu0
      %511 = vmatprep.mubr.f32.mxu0 0.0
      %512 = vmatmul.mubr.f32.gmra.mrb[0].mxu0 %v330
      %v513 = vpop.f32.mrb[0].mxu0
      %v514 = vadd.f32 %v232, %v513
      %v515 = vpop.f32.mrb[0].mxu0
      %516 = vmatprep.mubr.f32.mxu0 0.0
      %517 = vmatmul.mubr.f32.gmra.mrb[0].mxu0 %v333
      %v518 = vpop.f32.mrb[0].mxu0
      %v519 = vadd.f32 %v232, %v518
      %v520 = vpop.f32.mrb[0].mxu0
      %521 = vmatprep.mubr.f32.mxu0 0.0
      %522 = vmatmul.mubr.f32.gmra.mrb[0].mxu0 %v336
      %v523 = vpop.f32.mrb[0].mxu0
      %v524 = vadd.f32 %v232, %v523
      %v525 = vpop.f32.mrb[0].mxu0
      %526 = vmatprep.mubr.f32.mxu0 0.0
      %527 = vmatmul.mubr.f32.gmra.mrb[0].mxu0 %v339
      %v528 = vpop.f32.mrb[0].mxu0
      %v529 = vadd.f32 %v232, %v528
      %v530 = vpop.f32.mrb[0].mxu0
      %531 = vmatprep.mubr.f32.mxu0 0.0
      %532 = vmatmul.mubr.f32.gmra.mrb[0].mxu0 %v342
      %v533 = vpop.f32.mrb[0].mxu0
      %v534 = vadd.f32 %v232, %v533
      %v535 = vpop.f32.mrb[0].mxu0
      %536 = vmatprep.mubr.f32.mxu0 0.0
      %537 = vmatmul.mubr.f32.gmra.mrb[0].mxu0 %v345
      %v538 = vpop.f32.mrb[0].mxu0
      %v539 = vadd.f32 %v232, %v538
      %v540 = vpop.f32.mrb[0].mxu0
      %541 = vmatprep.mubr.f32.mxu0 0.0
      %542 = vmatmul.mubr.f32.gmra.mrb[0].mxu0 %v348
      %v543 = vpop.f32.mrb[0].mxu0
      %v544 = vadd.f32 %v232, %v543
      %v545 = vpop.f32.mrb[0].mxu0
      %546 = vmatprep.mubr.f32.mxu0 0.0
      %547 = vmatmul.mubr.f32.gmra.mrb[0].mxu0 %v351
      %v548 = vpop.f32.mrb[0].mxu0
      %v549 = vadd.f32 %v232, %v548
      %v550 = vpop.f32.mrb[0].mxu0
      %551 = vmatprep.mubr.f32.mxu0 0.0
      %552 = vmatmul.mubr.f32.gmra.mrb[0].mxu0 %v354
      %v553 = vpop.f32.mrb[0].mxu0
      %v554 = vadd.f32 %v232, %v553
      %v555 = vpop.f32.mrb[0].mxu0
      %556 = vmatprep.mubr.f32.mxu0 0.0
      %557 = vmatmul.mubr.f32.gmra.mrb[0].mxu0 %v357
      %v558 = vpop.f32.mrb[0].mxu0
      %v559 = vadd.f32 %v232, %v558
      %v560 = vpop.f32.mrb[0].mxu0
      %561 = vmatprep.mubr.f32.mxu0 0.0
      %562 = vmatmul.mubr.f32.gmra.mrb[0].mxu0 %v360
      %v563 = vpop.f32.mrb[0].mxu0
      %v564 = vadd.f32 %v232, %v563
      %v565 = vpop.f32.mrb[0].mxu0
      %566 = vmatprep.mubr.f32.mxu0 0.0
      %567 = vmatmul.mubr.f32.gmra.mrb[0].mxu0 %v363
      %v568 = vpop.f32.mrb[0].mxu0
      %v569 = vadd.f32 %v232, %v568
      %v570 = vpop.f32.mrb[0].mxu0
      %571 = vmatprep.mubr.f32.mxu0 0.0
      %572 = vmatmul.mubr.f32.gmra.mrb[0].mxu0 %v366
      %v573 = vpop.f32.mrb[0].mxu0
      %v574 = vadd.f32 %v232, %v573
      %v575 = vpop.f32.mrb[0].mxu0
      %576 = vmatprep.mubr.f32.mxu0 0.0
      %577 = vmatmul.mubr.f32.gmra.mrb[0].mxu0 %v369
      %v578 = vpop.f32.mrb[0].mxu0
      %v579 = vadd.f32 %v232, %v578
      %v580 = vpop.f32.mrb[0].mxu0
      %581 = vmatprep.mubr.f32.mxu0 0.0
      %582 = vmatmul.mubr.f32.gmra.mrb[0].mxu0 %v372
      %v583 = vpop.f32.mrb[0].mxu0
      %v584 = vadd.f32 %v232, %v583
      %v585 = vpop.f32.mrb[0].mxu0
      %586 = vmatprep.mubr.f32.mxu0 0.0
      %587 = vmatmul.mubr.f32.gmra.mrb[0].mxu0 %v375
      %v588 = vpop.f32.mrb[0].mxu0
      %v589 = vadd.f32 %v232, %v588
      %v590 = vpop.f32.mrb[0].mxu0
      %591 = vmatprep.mubr.f32.mxu0 0.0
      %592 = vmatmul.mubr.f32.gmra.mrb[0].mxu0 %v378
      %v593 = vpop.f32.mrb[0].mxu0
      %v594 = vadd.f32 %v232, %v593
      %v595 = vpop.f32.mrb[0].mxu0
      %596 = vmatprep.mubr.f32.mxu0 0.0
      %597 = vmatmul.mubr.f32.gmra.mrb[0].mxu0 %v381
      %v598 = vpop.f32.mrb[0].mxu0
      %v599 = vadd.f32 %v232, %v598
      %v600 = vpop.f32.mrb[0].mxu0
      %601 = vmatprep.mubr.f32.mxu0 0.0
      %602 = vmatmul.mubr.f32.gmra.mrb[0].mxu0 %v384
      %v603 = vpop.f32.mrb[0].mxu0
      %v604 = vadd.f32 %v232, %v603
      %v605 = vpop.f32.mrb[0].mxu0
      %606 = vmatprep.mubr.f32.mxu0 0.0
      %607 = vmatmul.mubr.f32.gmra.mrb[0].mxu0 %v387
      %v608 = vpop.f32.mrb[0].mxu0
      %v609 = vadd.f32 %v232, %v608
      %v610 = vpop.f32.mrb[0].mxu0
      %611 = vmatprep.mubr.f32.mxu0 0.0
      %612 = vmatmul.mubr.f32.gmra.mrb[0].mxu0 %v390
      %v613 = vpop.f32.mrb[0].mxu0
      %v614 = vadd.f32 %v232, %v613
      %v615 = vpop.f32.mrb[0].mxu0
      %616 = vmatprep.mubr.f32.mxu0 0.0
      %617 = vmatmul.mubr.f32.gmra.mrb[0].mxu0 %v393
      %v618 = vpop.f32.mrb[0].mxu0
      %v619 = vadd.f32 %v232, %v618
      %v620 = vpop.f32.mrb[0].mxu0
      %621 = vmatprep.mubr.f32.mxu0 0.0
      %622 = vmatmul.mubr.f32.gmra.mrb[0].mxu0 %v396
      %v623 = vpop.f32.mrb[0].mxu0
      %v624 = vadd.f32 %v232, %v623
      %v625 = vpop.f32.mrb[0].mxu0
      %626 = vdwg.mxu0
      %659 = vrot.lane.b32.xlu0 %v469, 126
      %v660 = vpop.permute.xlu0 %659
      %661 = vrot.lane.b32.xlu0 %v474, 126
      %v662 = vpop.permute.xlu0 %661
      %663 = vrot.lane.b32.xlu0 %v479, 126
      %v664 = vpop.permute.xlu0 %663
      %665 = vrot.lane.b32.xlu0 %v484, 126
      %v666 = vpop.permute.xlu0 %665
      %667 = vrot.lane.b32.xlu0 %v489, 126
      %v668 = vpop.permute.xlu0 %667
      %669 = vrot.lane.b32.xlu0 %v494, 126
      %v670 = vpop.permute.xlu0 %669
      %671 = vrot.lane.b32.xlu0 %v499, 126
      %v672 = vpop.permute.xlu0 %671
      %673 = vrot.lane.b32.xlu0 %v504, 126
      %v674 = vpop.permute.xlu0 %673
      %675 = vrot.lane.b32.xlu0 %v509, 126
      %v676 = vpop.permute.xlu0 %675
      %677 = vrot.lane.b32.xlu0 %v514, 126
      %v678 = vpop.permute.xlu0 %677
      %679 = vrot.lane.b32.xlu0 %v519, 126
      %v680 = vpop.permute.xlu0 %679
      %681 = vrot.lane.b32.xlu0 %v524, 126
      %v682 = vpop.permute.xlu0 %681
      %683 = vrot.lane.b32.xlu0 %v529, 126
      %v684 = vpop.permute.xlu0 %683
      %685 = vrot.lane.b32.xlu0 %v534, 126
      %v686 = vpop.permute.xlu0 %685
      %687 = vrot.lane.b32.xlu0 %v539, 126
      %v688 = vpop.permute.xlu0 %687
      %689 = vrot.lane.b32.xlu0 %v544, 126
      %v690 = vpop.permute.xlu0 %689
      %691 = vrot.lane.b32.xlu0 %v549, 126
      %v692 = vpop.permute.xlu0 %691
      %693 = vrot.lane.b32.xlu0 %v554, 126
      %v694 = vpop.permute.xlu0 %693
      %695 = vrot.lane.b32.xlu0 %v559, 126
      %v696 = vpop.permute.xlu0 %695
      %697 = vrot.lane.b32.xlu0 %v564, 126
      %v698 = vpop.permute.xlu0 %697
      %699 = vrot.lane.b32.xlu0 %v569, 126
      %v700 = vpop.permute.xlu0 %699
      %701 = vrot.lane.b32.xlu0 %v574, 126
      %v702 = vpop.permute.xlu0 %701
      %703 = vrot.lane.b32.xlu0 %v579, 126
      %v704 = vpop.permute.xlu0 %703
      %705 = vrot.lane.b32.xlu0 %v584, 126
      %v706 = vpop.permute.xlu0 %705
      %707 = vrot.lane.b32.xlu0 %v589, 126
      %v708 = vpop.permute.xlu0 %707
      %709 = vrot.lane.b32.xlu0 %v594, 126
      %v710 = vpop.permute.xlu0 %709
      %711 = vrot.lane.b32.xlu0 %v599, 126
      %v712 = vpop.permute.xlu0 %711
      %713 = vrot.lane.b32.xlu0 %v604, 126
      %v714 = vpop.permute.xlu0 %713
      %715 = vrot.lane.b32.xlu0 %v609, 126
      %v716 = vpop.permute.xlu0 %715
      %717 = vrot.lane.b32.xlu0 %v614, 126
      %v718 = vpop.permute.xlu0 %717
      %719 = vrot.lane.b32.xlu0 %v619, 126
      %v720 = vpop.permute.xlu0 %719
      %721 = vrot.lane.b32.xlu0 %v624, 126
      %v722 = vpop.permute.xlu0 %721
      %755 = vst.msk [vmem:[#allocation2] sm:$0xff] %vm301, %v660
      %756 = vst.msk [vmem:[#allocation2 + $0x8] sm:$0xff] %vm301, %v662
      %757 = vst.msk [vmem:[#allocation2 + $0x10] sm:$0xff] %vm301, %v664
      %758 = vst.msk [vmem:[#allocation2 + $0x18] sm:$0xff] %vm301, %v666
      %759 = vst.msk [vmem:[#allocation2 + $0x20] sm:$0xff] %vm301, %v668
      %760 = vst.msk [vmem:[#allocation2 + $0x28] sm:$0xff] %vm301, %v670
      %761 = vst.msk [vmem:[#allocation2 + $0x30] sm:$0xff] %vm301, %v672
      %762 = vst.msk [vmem:[#allocation2 + $0x38] sm:$0xff] %vm301, %v674
      %763 = vst.msk [vmem:[#allocation2 + $0x40] sm:$0xff] %vm301, %v676
      %764 = vst.msk [vmem:[#allocation2 + $0x48] sm:$0xff] %vm301, %v678
      %765 = vst.msk [vmem:[#allocation2 + $0x50] sm:$0xff] %vm301, %v680
      %766 = vst.msk [vmem:[#allocation2 + $0x58] sm:$0xff] %vm301, %v682
      %767 = vst.msk [vmem:[#allocation2 + $0x60] sm:$0xff] %vm301, %v684
      %768 = vst.msk [vmem:[#allocation2 + $0x68] sm:$0xff] %vm301, %v686
      %769 = vst.msk [vmem:[#allocation2 + $0x70] sm:$0xff] %vm301, %v688
      %770 = vst.msk [vmem:[#allocation2 + $0x78] sm:$0xff] %vm301, %v690
      %771 = vst.msk [vmem:[#allocation2 + $0x80] sm:$0xff] %vm301, %v692
      %772 = vst.msk [vmem:[#allocation2 + $0x88] sm:$0xff] %vm301, %v694
      %773 = vst.msk [vmem:[#allocation2 + $0x90] sm:$0xff] %vm301, %v696
      %774 = vst.msk [vmem:[#allocation2 + $0x98] sm:$0xff] %vm301, %v698
      %775 = vst.msk [vmem:[#allocation2 + $0xa0] sm:$0xff] %vm301, %v700
      %776 = vst.msk [vmem:[#allocation2 + $0xa8] sm:$0xff] %vm301, %v702
      %777 = vst.msk [vmem:[#allocation2 + $0xb0] sm:$0xff] %vm301, %v704
      %778 = vst.msk [vmem:[#allocation2 + $0xb8] sm:$0xff] %vm301, %v706
      %779 = vst.msk [vmem:[#allocation2 + $0xc0] sm:$0xff] %vm301, %v708
      %780 = vst.msk [vmem:[#allocation2 + $0xc8] sm:$0xff] %vm301, %v710
      %781 = vst.msk [vmem:[#allocation2 + $0xd0] sm:$0xff] %vm301, %v712
      %782 = vst.msk [vmem:[#allocation2 + $0xd8] sm:$0xff] %vm301, %v714
      %783 = vst.msk [vmem:[#allocation2 + $0xe0] sm:$0xff] %vm301, %v716
      %784 = vst.msk [vmem:[#allocation2 + $0xe8] sm:$0xff] %vm301, %v718
      %785 = vst.msk [vmem:[#allocation2 + $0xf0] sm:$0xff] %vm301, %v720
      %786 = vst.msk [vmem:[#allocation2 + $0xf8] sm:$0xff] %vm301, %v722
      %v787 = vld [vmem:[#allocation2] ss:$2 sm:$0xff]
      %s788 = scalar_lea.vmem [#allocation2], 16
      %v789 = vld [vmem:[%s788] ss:$2 sm:$0xff]
      %s790 = scalar_lea.vmem [#allocation2], 1
      %v791 = vld [vmem:[%s790] ss:$2 sm:$0xff]
      %s792 = scalar_lea.vmem [#allocation2], 17
      %v793 = vld [vmem:[%s792] ss:$2 sm:$0xff]
      %v794 = vmax.f32 %v787, %v791
      %v795 = vmax.f32 %v789, %v793
      %v796 = vmax.f32 %v794, %v795
      %797 = vst.msk [vmem:[#allocation3] sm:$0xff] %vm301, %v796
      %s798 = scalar_lea.vmem [#allocation2], 32
      %v799 = vld [vmem:[%s798] ss:$2 sm:$0xff]
      %s800 = scalar_lea.vmem [#allocation2], 48
      %v801 = vld [vmem:[%s800] ss:$2 sm:$0xff]
      %s802 = scalar_lea.vmem [#allocation2], 33
      %v803 = vld [vmem:[%s802] ss:$2 sm:$0xff]
      %s804 = scalar_lea.vmem [#allocation2], 49
      %v805 = vld [vmem:[%s804] ss:$2 sm:$0xff]
      %v806 = vmax.f32 %v799, %v803
      %v807 = vmax.f32 %v801, %v805
      %v808 = vmax.f32 %v806, %v807
      %809 = vst.msk [vmem:[#allocation3 + $0x8] sm:$0xff] %vm301, %v808
      %s810 = scalar_lea.vmem [#allocation2], 64
      %v811 = vld [vmem:[%s810] ss:$2 sm:$0xff]
      %s812 = scalar_lea.vmem [#allocation2], 80
      %v813 = vld [vmem:[%s812] ss:$2 sm:$0xff]
      %s814 = scalar_lea.vmem [#allocation2], 65
      %v815 = vld [vmem:[%s814] ss:$2 sm:$0xff]
      %s816 = scalar_lea.vmem [#allocation2], 81
      %v817 = vld [vmem:[%s816] ss:$2 sm:$0xff]
      %v818 = vmax.f32 %v811, %v815
      %v819 = vmax.f32 %v813, %v817
      %v820 = vmax.f32 %v818, %v819
      %821 = vst.msk [vmem:[#allocation3 + $0x10] sm:$0xff] %vm301, %v820
      %s822 = scalar_lea.vmem [#allocation2], 96
      %v823 = vld [vmem:[%s822] ss:$2 sm:$0xff]
      %s824 = scalar_lea.vmem [#allocation2], 112
      %v825 = vld [vmem:[%s824] ss:$2 sm:$0xff]
      %s826 = scalar_lea.vmem [#allocation2], 97
      %v827 = vld [vmem:[%s826] ss:$2 sm:$0xff]
      %s828 = scalar_lea.vmem [#allocation2], 113
      %v829 = vld [vmem:[%s828] ss:$2 sm:$0xff]
      %v830 = vmax.f32 %v823, %v827
      %v831 = vmax.f32 %v825, %v829
      %v832 = vmax.f32 %v830, %v831
      %833 = vst.msk [vmem:[#allocation3 + $0x18] sm:$0xff] %vm301, %v832
      %s834 = scalar_lea.vmem [#allocation2], 128
      %v835 = vld [vmem:[%s834] ss:$2 sm:$0xff]
      %s836 = scalar_lea.vmem [#allocation2], 144
      %v837 = vld [vmem:[%s836] ss:$2 sm:$0xff]
      %s838 = scalar_lea.vmem [#allocation2], 129
      %v839 = vld [vmem:[%s838] ss:$2 sm:$0xff]
      %s840 = scalar_lea.vmem [#allocation2], 145
      %v841 = vld [vmem:[%s840] ss:$2 sm:$0xff]
      %v842 = vmax.f32 %v835, %v839
      %v843 = vmax.f32 %v837, %v841
      %v844 = vmax.f32 %v842, %v843
      %845 = vst.msk [vmem:[#allocation3 + $0x20] sm:$0xff] %vm301, %v844
      %s846 = scalar_lea.vmem [#allocation2], 160
      %v847 = vld [vmem:[%s846] ss:$2 sm:$0xff]
      %s848 = scalar_lea.vmem [#allocation2], 176
      %v849 = vld [vmem:[%s848] ss:$2 sm:$0xff]
      %s850 = scalar_lea.vmem [#allocation2], 161
      %v851 = vld [vmem:[%s850] ss:$2 sm:$0xff]
      %s852 = scalar_lea.vmem [#allocation2], 177
      %v853 = vld [vmem:[%s852] ss:$2 sm:$0xff]
      %v854 = vmax.f32 %v847, %v851
      %v855 = vmax.f32 %v849, %v853
      %v856 = vmax.f32 %v854, %v855
      %857 = vst.msk [vmem:[#allocation3 + $0x28] sm:$0xff] %vm301, %v856
      %s858 = scalar_lea.vmem [#allocation2], 192
      %v859 = vld [vmem:[%s858] ss:$2 sm:$0xff]
      %s860 = scalar_lea.vmem [#allocation2], 208
      %v861 = vld [vmem:[%s860] ss:$2 sm:$0xff]
      %s862 = scalar_lea.vmem [#allocation2], 193
      %v863 = vld [vmem:[%s862] ss:$2 sm:$0xff]
      %s864 = scalar_lea.vmem [#allocation2], 209
      %v865 = vld [vmem:[%s864] ss:$2 sm:$0xff]
      %v866 = vmax.f32 %v859, %v863
      %v867 = vmax.f32 %v861, %v865
      %v868 = vmax.f32 %v866, %v867
      %869 = vst.msk [vmem:[#allocation3 + $0x30] sm:$0xff] %vm301, %v868
      %s870 = scalar_lea.vmem [#allocation2], 224
      %v871 = vld [vmem:[%s870] ss:$2 sm:$0xff]
      %s872 = scalar_lea.vmem [#allocation2], 240
      %v873 = vld [vmem:[%s872] ss:$2 sm:$0xff]
      %s874 = scalar_lea.vmem [#allocation2], 225
      %v875 = vld [vmem:[%s874] ss:$2 sm:$0xff]
      %s876 = scalar_lea.vmem [#allocation2], 241
      %v877 = vld [vmem:[%s876] ss:$2 sm:$0xff]
      %v878 = vmax.f32 %v871, %v875
      %v879 = vmax.f32 %v873, %v877
      %v880 = vmax.f32 %v878, %v879
      %881 = vst.msk [vmem:[#allocation3 + $0x38] sm:$0xff] %vm301, %v880
      %v882 = vld [vmem:[#allocation3] sm:$0xff]
      %v883 = vld [vmem:[#allocation3 + $0x8] sm:$0xff]
      %v884 = vld [vmem:[#allocation3 + $0x10] sm:$0xff]
      %v885 = vld [vmem:[#allocation3 + $0x18] sm:$0xff]
      %v886 = vld [vmem:[#allocation3 + $0x20] sm:$0xff]
      %v887 = vld [vmem:[#allocation3 + $0x28] sm:$0xff]
      %v888 = vld [vmem:[#allocation3 + $0x30] sm:$0xff]
      %v889 = vld [vmem:[#allocation3 + $0x38] sm:$0xff]
      %vm890 = vcmask 15360
      %v891 = vsel %vm890, %v469, 0
      %v893 = vsel %vm890, %v474, 0
      %v895 = vsel %vm890, %v479, 0
      %v897 = vsel %vm890, %v484, 0
      %v899 = vsel %vm890, %v489, 0
      %v901 = vsel %vm890, %v494, 0
      %v903 = vsel %vm890, %v499, 0
      %v905 = vsel %vm890, %v504, 0
      %v907 = vsel %vm890, %v509, 0
      %v909 = vsel %vm890, %v514, 0
      %v911 = vsel %vm890, %v519, 0
      %v913 = vsel %vm890, %v524, 0
      %v915 = vsel %vm890, %v529, 0
      %v917 = vsel %vm890, %v534, 0
      %v919 = vsel %vm890, %v539, 0
      %v921 = vsel %vm890, %v544, 0
      %v923 = vsel %vm890, %v549, 0
      %v925 = vsel %vm890, %v554, 0
      %v927 = vsel %vm890, %v559, 0
      %v929 = vsel %vm890, %v564, 0
      %v931 = vsel %vm890, %v569, 0
      %v933 = vsel %vm890, %v574, 0
      %v935 = vsel %vm890, %v579, 0
      %v937 = vsel %vm890, %v584, 0
      %v939 = vsel %vm890, %v589, 0
      %v941 = vsel %vm890, %v594, 0
      %v943 = vsel %vm890, %v599, 0
      %v945 = vsel %vm890, %v604, 0
      %v947 = vsel %vm890, %v609, 0
      %v949 = vsel %vm890, %v614, 0
      %v951 = vsel %vm890, %v619, 0
      %v953 = vsel %vm890, %v624, 0
      %v956 = vsel %vm890, %v882, 0
      %v959 = vsel %vm890, %v883, 0
      %v962 = vsel %vm890, %v884, 0
      %v965 = vsel %vm890, %v885, 0
      %v968 = vsel %vm890, %v886, 0
      %v971 = vsel %vm890, %v887, 0
      %v974 = vsel %vm890, %v888, 0
      %v977 = vsel %vm890, %v889, 0
      %979 = vmatprep.subr.mxu0 0.0
      %980 = vmatpush1.xpose.msra.mxu0 %v956
      %981 = vmatprep.subr.mxu0 0.0
      %982 = vmatpush1.xpose.msra.mxu0 %v959
      %983 = vmatprep.subr.mxu0 0.0
      %984 = vmatpush1.xpose.msra.mxu0 %v962
      %985 = vmatprep.subr.mxu0 0.0
      %986 = vmatpush1.xpose.msra.mxu0 %v965
      %987 = vmatprep.subr.mxu0 0.0
      %988 = vmatpush1.xpose.msra.mxu0 %v968
      %989 = vmatprep.subr.mxu0 0.0
      %990 = vmatpush1.xpose.msra.mxu0 %v971
      %991 = vmatprep.subr.mxu0 0.0
      %992 = vmatpush1.xpose.msra.mxu0 %v974
      %993 = vmatprep.subr.mxu0 0.0
      %994 = vmatpush1.xpose.msra.mxu0 %v977
      %995 = vmatprep.subr.mxu0 0.0
      %996 = vmatpush1.xpose.msra.mxu0 0.0
      %997 = vmatprep.subr.mxu0 0.0
      %998 = vmatpush1.xpose.msra.mxu0 0.0
      %999 = vmatprep.subr.mxu0 0.0
      %1000 = vmatpush1.xpose.msra.mxu0 0.0
      %1001 = vmatprep.subr.mxu0 0.0
      %1002 = vmatpush1.xpose.msra.mxu0 0.0
      %1003 = vmatprep.subr.mxu0 0.0
      %1004 = vmatpush1.xpose.msra.mxu0 0.0
      %1005 = vmatprep.subr.mxu0 0.0
      %1006 = vmatpush1.xpose.msra.mxu0 0.0
      %1007 = vmatprep.subr.mxu0 0.0
      %1008 = vmatpush1.xpose.msra.mxu0 0.0
      %1009 = vmatprep.subr.mxu0 0.0
      %1010 = vmatpush1.xpose.msra.mxu0 0.0
      %1011 = vmatprep.subr.mxu0 0.0
      %1012 = vmatpush1.xpose.msra.mxu0 0.0
      %1013 = vmatprep.subr.mxu0 0.0
      %1014 = vmatpush1.xpose.msra.mxu0 0.0
      %1015 = vmatprep.subr.mxu0 0.0
      %1016 = vmatpush1.xpose.msra.mxu0 0.0
      %1017 = vmatprep.subr.mxu0 0.0
      %1018 = vmatpush1.xpose.msra.mxu0 0.0
      %1019 = vmatprep.subr.mxu0 0.0
      %1020 = vmatpush1.xpose.msra.mxu0 0.0
      %1021 = vmatprep.subr.mxu0 0.0
      %1022 = vmatpush1.xpose.msra.mxu0 0.0
      %1023 = vmatprep.subr.mxu0 0.0
      %1024 = vmatpush1.xpose.msra.mxu0 0.0
      %1025 = vmatprep.subr.mxu0 0.0
      %1026 = vmatpush1.xpose.msra.mxu0 0.0
      %1027 = vmatprep.subr.mxu0 0.0
      %1028 = vmatpush1.xpose.msra.mxu0 0.0
      %1029 = vmatprep.subr.mxu0 0.0
      %1030 = vmatpush1.xpose.msra.mxu0 0.0
      %1031 = vmatprep.subr.mxu0 0.0
      %1032 = vmatpush1.xpose.msra.mxu0 0.0
      %1033 = vmatprep.subr.mxu0 0.0
      %1034 = vmatpush1.xpose.msra.mxu0 0.0
      %1035 = vmatprep.subr.mxu0 0.0
      %1036 = vmatpush1.xpose.msra.mxu0 0.0
      %1037 = vmatprep.subr.mxu0 0.0
      %1038 = vmatpush1.xpose.msra.mxu0 0.0
      %1039 = vmatprep.subr.mxu0 0.0
      %1040 = vmatpush1.xpose.msra.mxu0 0.0
      %1041 = vmatprep.subr.mxu0 0.0
      %1042 = vmatpush1.xpose.msra.mxu0 0.0
      %1043 = vmatprep.mubr.f32.mxu0 0.0
      %1044 = vmatmul.mubr.f32.gmra.mrb[0].mxu0 %v891
      %v1045 = vpop.f32.mrb[0].mxu0
      %v1046 = vadd.f32 0.0, %v1045
      %v1047 = vpop.f32.mrb[0].mxu0
      %1048 = vmatprep.mubr.f32.mxu0 0.0
      %1049 = vmatmul.mubr.f32.gmra.mrb[0].mxu0 %v893
      %v1050 = vpop.f32.mrb[0].mxu0
      %v1051 = vadd.f32 0.0, %v1050
      %v1052 = vpop.f32.mrb[0].mxu0
      %1053 = vmatprep.mubr.f32.mxu0 0.0
      %1054 = vmatmul.mubr.f32.gmra.mrb[0].mxu0 %v895
      %v1055 = vpop.f32.mrb[0].mxu0
      %v1056 = vadd.f32 0.0, %v1055
      %v1057 = vpop.f32.mrb[0].mxu0
      %1058 = vmatprep.mubr.f32.mxu0 0.0
      %1059 = vmatmul.mubr.f32.gmra.mrb[0].mxu0 %v897
      %v1060 = vpop.f32.mrb[0].mxu0
      %v1061 = vadd.f32 0.0, %v1060
      %v1062 = vpop.f32.mrb[0].mxu0
      %1063 = vmatprep.mubr.f32.mxu0 0.0
      %1064 = vmatmul.mubr.f32.gmra.mrb[0].mxu0 %v899
      %v1065 = vpop.f32.mrb[0].mxu0
      %v1066 = vadd.f32 0.0, %v1065
      %v1067 = vpop.f32.mrb[0].mxu0
      %1068 = vmatprep.mubr.f32.mxu0 0.0
      %1069 = vmatmul.mubr.f32.gmra.mrb[0].mxu0 %v901
      %v1070 = vpop.f32.mrb[0].mxu0
      %v1071 = vadd.f32 0.0, %v1070
      %v1072 = vpop.f32.mrb[0].mxu0
      %1073 = vmatprep.mubr.f32.mxu0 0.0
      %1074 = vmatmul.mubr.f32.gmra.mrb[0].mxu0 %v903
      %v1075 = vpop.f32.mrb[0].mxu0
      %v1076 = vadd.f32 0.0, %v1075
      %v1077 = vpop.f32.mrb[0].mxu0
      %1078 = vmatprep.mubr.f32.mxu0 0.0
      %1079 = vmatmul.mubr.f32.gmra.mrb[0].mxu0 %v905
      %v1080 = vpop.f32.mrb[0].mxu0
      %v1081 = vadd.f32 0.0, %v1080
      %v1082 = vpop.f32.mrb[0].mxu0
      %1083 = vmatprep.mubr.f32.mxu0 0.0
      %1084 = vmatmul.mubr.f32.gmra.mrb[0].mxu0 %v907
      %v1085 = vpop.f32.mrb[0].mxu0
      %v1086 = vadd.f32 0.0, %v1085
      %v1087 = vpop.f32.mrb[0].mxu0
      %1088 = vmatprep.mubr.f32.mxu0 0.0
      %1089 = vmatmul.mubr.f32.gmra.mrb[0].mxu0 %v909
      %v1090 = vpop.f32.mrb[0].mxu0
      %v1091 = vadd.f32 0.0, %v1090
      %v1092 = vpop.f32.mrb[0].mxu0
      %1093 = vmatprep.mubr.f32.mxu0 0.0
      %1094 = vmatmul.mubr.f32.gmra.mrb[0].mxu0 %v911
      %v1095 = vpop.f32.mrb[0].mxu0
      %v1096 = vadd.f32 0.0, %v1095
      %v1097 = vpop.f32.mrb[0].mxu0
      %1098 = vmatprep.mubr.f32.mxu0 0.0
      %1099 = vmatmul.mubr.f32.gmra.mrb[0].mxu0 %v913
      %v1100 = vpop.f32.mrb[0].mxu0
      %v1101 = vadd.f32 0.0, %v1100
      %v1102 = vpop.f32.mrb[0].mxu0
      %1103 = vmatprep.mubr.f32.mxu0 0.0
      %1104 = vmatmul.mubr.f32.gmra.mrb[0].mxu0 %v915
      %v1105 = vpop.f32.mrb[0].mxu0
      %v1106 = vadd.f32 0.0, %v1105
      %v1107 = vpop.f32.mrb[0].mxu0
      %1108 = vmatprep.mubr.f32.mxu0 0.0
      %1109 = vmatmul.mubr.f32.gmra.mrb[0].mxu0 %v917
      %v1110 = vpop.f32.mrb[0].mxu0
      %v1111 = vadd.f32 0.0, %v1110
      %v1112 = vpop.f32.mrb[0].mxu0
      %1113 = vmatprep.mubr.f32.mxu0 0.0
      %1114 = vmatmul.mubr.f32.gmra.mrb[0].mxu0 %v919
      %v1115 = vpop.f32.mrb[0].mxu0
      %v1116 = vadd.f32 0.0, %v1115
      %v1117 = vpop.f32.mrb[0].mxu0
      %1118 = vmatprep.mubr.f32.mxu0 0.0
      %1119 = vmatmul.mubr.f32.gmra.mrb[0].mxu0 %v921
      %v1120 = vpop.f32.mrb[0].mxu0
      %v1121 = vadd.f32 0.0, %v1120
      %v1122 = vpop.f32.mrb[0].mxu0
      %1123 = vmatprep.mubr.f32.mxu0 0.0
      %1124 = vmatmul.mubr.f32.gmra.mrb[0].mxu0 %v923
      %v1125 = vpop.f32.mrb[0].mxu0
      %v1126 = vadd.f32 0.0, %v1125
      %v1127 = vpop.f32.mrb[0].mxu0
      %1128 = vmatprep.mubr.f32.mxu0 0.0
      %1129 = vmatmul.mubr.f32.gmra.mrb[0].mxu0 %v925
      %v1130 = vpop.f32.mrb[0].mxu0
      %v1131 = vadd.f32 0.0, %v1130
      %v1132 = vpop.f32.mrb[0].mxu0
      %1133 = vmatprep.mubr.f32.mxu0 0.0
      %1134 = vmatmul.mubr.f32.gmra.mrb[0].mxu0 %v927
      %v1135 = vpop.f32.mrb[0].mxu0
      %v1136 = vadd.f32 0.0, %v1135
      %v1137 = vpop.f32.mrb[0].mxu0
      %1138 = vmatprep.mubr.f32.mxu0 0.0
      %1139 = vmatmul.mubr.f32.gmra.mrb[0].mxu0 %v929
      %v1140 = vpop.f32.mrb[0].mxu0
      %v1141 = vadd.f32 0.0, %v1140
      %v1142 = vpop.f32.mrb[0].mxu0
      %1143 = vmatprep.mubr.f32.mxu0 0.0
      %1144 = vmatmul.mubr.f32.gmra.mrb[0].mxu0 %v931
      %v1145 = vpop.f32.mrb[0].mxu0
      %v1146 = vadd.f32 0.0, %v1145
      %v1147 = vpop.f32.mrb[0].mxu0
      %1148 = vmatprep.mubr.f32.mxu0 0.0
      %1149 = vmatmul.mubr.f32.gmra.mrb[0].mxu0 %v933
      %v1150 = vpop.f32.mrb[0].mxu0
      %v1151 = vadd.f32 0.0, %v1150
      %v1152 = vpop.f32.mrb[0].mxu0
      %1153 = vmatprep.mubr.f32.mxu0 0.0
      %1154 = vmatmul.mubr.f32.gmra.mrb[0].mxu0 %v935
      %v1155 = vpop.f32.mrb[0].mxu0
      %v1156 = vadd.f32 0.0, %v1155
      %v1157 = vpop.f32.mrb[0].mxu0
      %1158 = vmatprep.mubr.f32.mxu0 0.0
      %1159 = vmatmul.mubr.f32.gmra.mrb[0].mxu0 %v937
      %v1160 = vpop.f32.mrb[0].mxu0
      %v1161 = vadd.f32 0.0, %v1160
      %v1162 = vpop.f32.mrb[0].mxu0
      %1163 = vmatprep.mubr.f32.mxu0 0.0
      %1164 = vmatmul.mubr.f32.gmra.mrb[0].mxu0 %v939
      %v1165 = vpop.f32.mrb[0].mxu0
      %v1166 = vadd.f32 0.0, %v1165
      %v1167 = vpop.f32.mrb[0].mxu0
      %1168 = vmatprep.mubr.f32.mxu0 0.0
      %1169 = vmatmul.mubr.f32.gmra.mrb[0].mxu0 %v941
      %v1170 = vpop.f32.mrb[0].mxu0
      %v1171 = vadd.f32 0.0, %v1170
      %v1172 = vpop.f32.mrb[0].mxu0
      %1173 = vmatprep.mubr.f32.mxu0 0.0
      %1174 = vmatmul.mubr.f32.gmra.mrb[0].mxu0 %v943
      %v1175 = vpop.f32.mrb[0].mxu0
      %v1176 = vadd.f32 0.0, %v1175
      %v1177 = vpop.f32.mrb[0].mxu0
      %1178 = vmatprep.mubr.f32.mxu0 0.0
      %1179 = vmatmul.mubr.f32.gmra.mrb[0].mxu0 %v945
      %v1180 = vpop.f32.mrb[0].mxu0
      %v1181 = vadd.f32 0.0, %v1180
      %v1182 = vpop.f32.mrb[0].mxu0
      %1183 = vmatprep.mubr.f32.mxu0 0.0
      %1184 = vmatmul.mubr.f32.gmra.mrb[0].mxu0 %v947
      %v1185 = vpop.f32.mrb[0].mxu0
      %v1186 = vadd.f32 0.0, %v1185
      %v1187 = vpop.f32.mrb[0].mxu0
      %1188 = vmatprep.mubr.f32.mxu0 0.0
      %1189 = vmatmul.mubr.f32.gmra.mrb[0].mxu0 %v949
      %v1190 = vpop.f32.mrb[0].mxu0
      %v1191 = vadd.f32 0.0, %v1190
      %v1192 = vpop.f32.mrb[0].mxu0
      %1193 = vmatprep.mubr.f32.mxu0 0.0
      %1194 = vmatmul.mubr.f32.gmra.mrb[0].mxu0 %v951
      %v1195 = vpop.f32.mrb[0].mxu0
      %v1196 = vadd.f32 0.0, %v1195
      %v1197 = vpop.f32.mrb[0].mxu0
      %1198 = vmatprep.mubr.f32.mxu0 0.0
      %1199 = vmatmul.mubr.f32.gmra.mrb[0].mxu0 %v953
      %v1200 = vpop.f32.mrb[0].mxu0
      %v1201 = vadd.f32 0.0, %v1200
      %v1202 = vpop.f32.mrb[0].mxu0
      %1203 = vdwg.mxu0
      %vm1204 = vcmask 523264
      %v1205 = vsel %vm1204, %v1046, -inf
      %1206 = vmax.xlane.f32.xlu0 %v1205
      %v1207 = vpop.xlane.xlu0 %1206
      %v1208 = vsel %vm1204, %v1051, -inf
      %1209 = vmax.xlane.f32.xlu0 %v1208
      %v1210 = vpop.xlane.xlu0 %1209
      %v1211 = vsel %vm1204, %v1056, -inf
      %1212 = vmax.xlane.f32.xlu0 %v1211
      %v1213 = vpop.xlane.xlu0 %1212
      %v1214 = vsel %vm1204, %v1061, -inf
      %1215 = vmax.xlane.f32.xlu0 %v1214
      %v1216 = vpop.xlane.xlu0 %1215
      %v1217 = vsel %vm1204, %v1066, -inf
      %1218 = vmax.xlane.f32.xlu0 %v1217
      %v1219 = vpop.xlane.xlu0 %1218
      %v1220 = vsel %vm1204, %v1071, -inf
      %1221 = vmax.xlane.f32.xlu0 %v1220
      %v1222 = vpop.xlane.xlu0 %1221
      %v1223 = vsel %vm1204, %v1076, -inf
      %1224 = vmax.xlane.f32.xlu0 %v1223
      %v1225 = vpop.xlane.xlu0 %1224
      %v1226 = vsel %vm1204, %v1081, -inf
      %1227 = vmax.xlane.f32.xlu0 %v1226
      %v1228 = vpop.xlane.xlu0 %1227
      %v1229 = vsel %vm1204, %v1086, -inf
      %1230 = vmax.xlane.f32.xlu0 %v1229
      %v1231 = vpop.xlane.xlu0 %1230
      %v1232 = vsel %vm1204, %v1091, -inf
      %1233 = vmax.xlane.f32.xlu0 %v1232
      %v1234 = vpop.xlane.xlu0 %1233
      %v1235 = vsel %vm1204, %v1096, -inf
      %1236 = vmax.xlane.f32.xlu0 %v1235
      %v1237 = vpop.xlane.xlu0 %1236
      %v1238 = vsel %vm1204, %v1101, -inf
      %1239 = vmax.xlane.f32.xlu0 %v1238
      %v1240 = vpop.xlane.xlu0 %1239
      %v1241 = vsel %vm1204, %v1106, -inf
      %1242 = vmax.xlane.f32.xlu0 %v1241
      %v1243 = vpop.xlane.xlu0 %1242
      %v1244 = vsel %vm1204, %v1111, -inf
      %1245 = vmax.xlane.f32.xlu0 %v1244
      %v1246 = vpop.xlane.xlu0 %1245
      %v1247 = vsel %vm1204, %v1116, -inf
      %1248 = vmax.xlane.f32.xlu0 %v1247
      %v1249 = vpop.xlane.xlu0 %1248
      %v1250 = vsel %vm1204, %v1121, -inf
      %1251 = vmax.xlane.f32.xlu0 %v1250
      %v1252 = vpop.xlane.xlu0 %1251
      %v1253 = vsel %vm1204, %v1126, -inf
      %1254 = vmax.xlane.f32.xlu0 %v1253
      %v1255 = vpop.xlane.xlu0 %1254
      %v1256 = vsel %vm1204, %v1131, -inf
      %1257 = vmax.xlane.f32.xlu0 %v1256
      %v1258 = vpop.xlane.xlu0 %1257
      %v1259 = vsel %vm1204, %v1136, -inf
      %1260 = vmax.xlane.f32.xlu0 %v1259
      %v1261 = vpop.xlane.xlu0 %1260
      %v1262 = vsel %vm1204, %v1141, -inf
      %1263 = vmax.xlane.f32.xlu0 %v1262
      %v1264 = vpop.xlane.xlu0 %1263
      %v1265 = vsel %vm1204, %v1146, -inf
      %1266 = vmax.xlane.f32.xlu0 %v1265
      %v1267 = vpop.xlane.xlu0 %1266
      %v1268 = vsel %vm1204, %v1151, -inf
      %1269 = vmax.xlane.f32.xlu0 %v1268
      %v1270 = vpop.xlane.xlu0 %1269
      %v1271 = vsel %vm1204, %v1156, -inf
      %1272 = vmax.xlane.f32.xlu0 %v1271
      %v1273 = vpop.xlane.xlu0 %1272
      %v1274 = vsel %vm1204, %v1161, -inf
      %1275 = vmax.xlane.f32.xlu0 %v1274
      %v1276 = vpop.xlane.xlu0 %1275
      %v1277 = vsel %vm1204, %v1166, -inf
      %1278 = vmax.xlane.f32.xlu0 %v1277
      %v1279 = vpop.xlane.xlu0 %1278
      %v1280 = vsel %vm1204, %v1171, -inf
      %1281 = vmax.xlane.f32.xlu0 %v1280
      %v1282 = vpop.xlane.xlu0 %1281
      %v1283 = vsel %vm1204, %v1176, -inf
      %1284 = vmax.xlane.f32.xlu0 %v1283
      %v1285 = vpop.xlane.xlu0 %1284
      %v1286 = vsel %vm1204, %v1181, -inf
      %1287 = vmax.xlane.f32.xlu0 %v1286
      %v1288 = vpop.xlane.xlu0 %1287
      %v1289 = vsel %vm1204, %v1186, -inf
      %1290 = vmax.xlane.f32.xlu0 %v1289
      %v1291 = vpop.xlane.xlu0 %1290
      %v1292 = vsel %vm1204, %v1191, -inf
      %1293 = vmax.xlane.f32.xlu0 %v1292
      %v1294 = vpop.xlane.xlu0 %1293
      %v1295 = vsel %vm1204, %v1196, -inf
      %1296 = vmax.xlane.f32.xlu0 %v1295
      %v1297 = vpop.xlane.xlu0 %1296
      %v1298 = vsel %vm1204, %v1201, -inf
      %1299 = vmax.xlane.f32.xlu0 %v1298
      %v1300 = vpop.xlane.xlu0 %1299
      %v1301 = vsub.f32 %v1046, %v1207
      %v1302 = vsub.f32 %v1051, %v1210
      %v1303 = vsub.f32 %v1056, %v1213
      %v1304 = vsub.f32 %v1061, %v1216
      %v1305 = vsub.f32 %v1066, %v1219
      %v1306 = vsub.f32 %v1071, %v1222
      %v1307 = vsub.f32 %v1076, %v1225
      %v1308 = vsub.f32 %v1081, %v1228
      %v1309 = vsub.f32 %v1086, %v1231
      %v1310 = vsub.f32 %v1091, %v1234
      %v1311 = vsub.f32 %v1096, %v1237
      %v1312 = vsub.f32 %v1101, %v1240
      %v1313 = vsub.f32 %v1106, %v1243
      %v1314 = vsub.f32 %v1111, %v1246
      %v1315 = vsub.f32 %v1116, %v1249
      %v1316 = vsub.f32 %v1121, %v1252
      %v1317 = vsub.f32 %v1126, %v1255
      %v1318 = vsub.f32 %v1131, %v1258
      %v1319 = vsub.f32 %v1136, %v1261
      %v1320 = vsub.f32 %v1141, %v1264
      %v1321 = vsub.f32 %v1146, %v1267
      %v1322 = vsub.f32 %v1151, %v1270
      %v1323 = vsub.f32 %v1156, %v1273
      %v1324 = vsub.f32 %v1161, %v1276
      %v1325 = vsub.f32 %v1166, %v1279
      %v1326 = vsub.f32 %v1171, %v1282
      %v1327 = vsub.f32 %v1176, %v1285
      %v1328 = vsub.f32 %v1181, %v1288
      %v1329 = vsub.f32 %v1186, %v1291
      %v1330 = vsub.f32 %v1191, %v1294
      %v1331 = vsub.f32 %v1196, %v1297
      %v1332 = vsub.f32 %v1201, %v1300
      %v1333 = vmul.f32 %v1301, 1.442695
      %v1334 = vpow.pop %v1333
      %v1335 = vmul.f32 %v1302, 1.442695
      %v1336 = vpow.pop %v1335
      %v1337 = vmul.f32 %v1303, 1.442695
      %v1338 = vpow.pop %v1337
      %v1339 = vmul.f32 %v1304, 1.442695
      %v1340 = vpow.pop %v1339
      %v1341 = vmul.f32 %v1305, 1.442695
      %v1342 = vpow.pop %v1341
      %v1343 = vmul.f32 %v1306, 1.442695
      %v1344 = vpow.pop %v1343
      %v1345 = vmul.f32 %v1307, 1.442695
      %v1346 = vpow.pop %v1345
      %v1347 = vmul.f32 %v1308, 1.442695
      %v1348 = vpow.pop %v1347
      %v1349 = vmul.f32 %v1309, 1.442695
      %v1350 = vpow.pop %v1349
      %v1351 = vmul.f32 %v1310, 1.442695
      %v1352 = vpow.pop %v1351
      %v1353 = vmul.f32 %v1311, 1.442695
      %v1354 = vpow.pop %v1353
      %v1355 = vmul.f32 %v1312, 1.442695
      %v1356 = vpow.pop %v1355
      %v1357 = vmul.f32 %v1313, 1.442695
      %v1358 = vpow.pop %v1357
      %v1359 = vmul.f32 %v1314, 1.442695
      %v1360 = vpow.pop %v1359
      %v1361 = vmul.f32 %v1315, 1.442695
      %v1362 = vpow.pop %v1361
      %v1363 = vmul.f32 %v1316, 1.442695
      %v1364 = vpow.pop %v1363
      %v1365 = vmul.f32 %v1317, 1.442695
      %v1366 = vpow.pop %v1365
      %v1367 = vmul.f32 %v1318, 1.442695
      %v1368 = vpow.pop %v1367
      %v1369 = vmul.f32 %v1319, 1.442695
      %v1370 = vpow.pop %v1369
      %v1371 = vmul.f32 %v1320, 1.442695
      %v1372 = vpow.pop %v1371
      %v1373 = vmul.f32 %v1321, 1.442695
      %v1374 = vpow.pop %v1373
      %v1375 = vmul.f32 %v1322, 1.442695
      %v1376 = vpow.pop %v1375
      %v1377 = vmul.f32 %v1323, 1.442695
      %v1378 = vpow.pop %v1377
      %v1379 = vmul.f32 %v1324, 1.442695
      %v1380 = vpow.pop %v1379
      %v1381 = vmul.f32 %v1325, 1.442695
      %v1382 = vpow.pop %v1381
      %v1383 = vmul.f32 %v1326, 1.442695
      %v1384 = vpow.pop %v1383
      %v1385 = vmul.f32 %v1327, 1.442695
      %v1386 = vpow.pop %v1385
      %v1387 = vmul.f32 %v1328, 1.442695
      %v1388 = vpow.pop %v1387
      %v1389 = vmul.f32 %v1329, 1.442695
      %v1390 = vpow.pop %v1389
      %v1391 = vmul.f32 %v1330, 1.442695
      %v1392 = vpow.pop %v1391
      %v1393 = vmul.f32 %v1331, 1.442695
      %v1394 = vpow.pop %v1393
      %v1395 = vmul.f32 %v1332, 1.442695
      %v1396 = vpow.pop %v1395
      %v1397 = vsel %vm1204, %v1334, 0.0
      %1398 = vadd.xlane.f32.xlu0 %v1397
      %v1399 = vpop.xlane.xlu0 %1398
      %v1400 = vsel %vm1204, %v1336, 0.0
      %1401 = vadd.xlane.f32.xlu0 %v1400
      %v1402 = vpop.xlane.xlu0 %1401
      %v1403 = vsel %vm1204, %v1338, 0.0
      %1404 = vadd.xlane.f32.xlu0 %v1403
      %v1405 = vpop.xlane.xlu0 %1404
      %v1406 = vsel %vm1204, %v1340, 0.0
      %1407 = vadd.xlane.f32.xlu0 %v1406
      %v1408 = vpop.xlane.xlu0 %1407
      %v1409 = vsel %vm1204, %v1342, 0.0
      %1410 = vadd.xlane.f32.xlu0 %v1409
      %v1411 = vpop.xlane.xlu0 %1410
      %v1412 = vsel %vm1204, %v1344, 0.0
      %1413 = vadd.xlane.f32.xlu0 %v1412
      %v1414 = vpop.xlane.xlu0 %1413
      %v1415 = vsel %vm1204, %v1346, 0.0
      %1416 = vadd.xlane.f32.xlu0 %v1415
      %v1417 = vpop.xlane.xlu0 %1416
      %v1418 = vsel %vm1204, %v1348, 0.0
      %1419 = vadd.xlane.f32.xlu0 %v1418
      %v1420 = vpop.xlane.xlu0 %1419
      %v1421 = vsel %vm1204, %v1350, 0.0
      %1422 = vadd.xlane.f32.xlu0 %v1421
      %v1423 = vpop.xlane.xlu0 %1422
      %v1424 = vsel %vm1204, %v1352, 0.0
      %1425 = vadd.xlane.f32.xlu0 %v1424
      %v1426 = vpop.xlane.xlu0 %1425
      %v1427 = vsel %vm1204, %v1354, 0.0
      %1428 = vadd.xlane.f32.xlu0 %v1427
      %v1429 = vpop.xlane.xlu0 %1428
      %v1430 = vsel %vm1204, %v1356, 0.0
      %1431 = vadd.xlane.f32.xlu0 %v1430
      %v1432 = vpop.xlane.xlu0 %1431
      %v1433 = vsel %vm1204, %v1358, 0.0
      %1434 = vadd.xlane.f32.xlu0 %v1433
      %v1435 = vpop.xlane.xlu0 %1434
      %v1436 = vsel %vm1204, %v1360, 0.0
      %1437 = vadd.xlane.f32.xlu0 %v1436
      %v1438 = vpop.xlane.xlu0 %1437
      %v1439 = vsel %vm1204, %v1362, 0.0
      %1440 = vadd.xlane.f32.xlu0 %v1439
      %v1441 = vpop.xlane.xlu0 %1440
      %v1442 = vsel %vm1204, %v1364, 0.0
      %1443 = vadd.xlane.f32.xlu0 %v1442
      %v1444 = vpop.xlane.xlu0 %1443
      %v1445 = vsel %vm1204, %v1366, 0.0
      %1446 = vadd.xlane.f32.xlu0 %v1445
      %v1447 = vpop.xlane.xlu0 %1446
      %v1448 = vsel %vm1204, %v1368, 0.0
      %1449 = vadd.xlane.f32.xlu0 %v1448
      %v1450 = vpop.xlane.xlu0 %1449
      %v1451 = vsel %vm1204, %v1370, 0.0
      %1452 = vadd.xlane.f32.xlu0 %v1451
      %v1453 = vpop.xlane.xlu0 %1452
      %v1454 = vsel %vm1204, %v1372, 0.0
      %1455 = vadd.xlane.f32.xlu0 %v1454
      %v1456 = vpop.xlane.xlu0 %1455
      %v1457 = vsel %vm1204, %v1374, 0.0
      %1458 = vadd.xlane.f32.xlu0 %v1457
      %v1459 = vpop.xlane.xlu0 %1458
      %v1460 = vsel %vm1204, %v1376, 0.0
      %1461 = vadd.xlane.f32.xlu0 %v1460
      %v1462 = vpop.xlane.xlu0 %1461
      %v1463 = vsel %vm1204, %v1378, 0.0
      %1464 = vadd.xlane.f32.xlu0 %v1463
      %v1465 = vpop.xlane.xlu0 %1464
      %v1466 = vsel %vm1204, %v1380, 0.0
      %1467 = vadd.xlane.f32.xlu0 %v1466
      %v1468 = vpop.xlane.xlu0 %1467
      %v1469 = vsel %vm1204, %v1382, 0.0
      %1470 = vadd.xlane.f32.xlu0 %v1469
      %v1471 = vpop.xlane.xlu0 %1470
      %v1472 = vsel %vm1204, %v1384, 0.0
      %1473 = vadd.xlane.f32.xlu0 %v1472
      %v1474 = vpop.xlane.xlu0 %1473
      %v1475 = vsel %vm1204, %v1386, 0.0
      %1476 = vadd.xlane.f32.xlu0 %v1475
      %v1477 = vpop.xlane.xlu0 %1476
      %v1478 = vsel %vm1204, %v1388, 0.0
      %1479 = vadd.xlane.f32.xlu0 %v1478
      %v1480 = vpop.xlane.xlu0 %1479
      %v1481 = vsel %vm1204, %v1390, 0.0
      %1482 = vadd.xlane.f32.xlu0 %v1481
      %v1483 = vpop.xlane.xlu0 %1482
      %v1484 = vsel %vm1204, %v1392, 0.0
      %1485 = vadd.xlane.f32.xlu0 %v1484
      %v1486 = vpop.xlane.xlu0 %1485
      %v1487 = vsel %vm1204, %v1394, 0.0
      %1488 = vadd.xlane.f32.xlu0 %v1487
      %v1489 = vpop.xlane.xlu0 %1488
      %v1490 = vsel %vm1204, %v1396, 0.0
      %1491 = vadd.xlane.f32.xlu0 %v1490
      %v1492 = vpop.xlane.xlu0 %1491
      %v1493 = vrcp.pop %v1399
      %v1494 = vrcp.pop %v1402
      %v1495 = vrcp.pop %v1405
      %v1496 = vrcp.pop %v1408
      %v1497 = vrcp.pop %v1411
      %v1498 = vrcp.pop %v1414
      %v1499 = vrcp.pop %v1417
      %v1500 = vrcp.pop %v1420
      %v1501 = vrcp.pop %v1423
      %v1502 = vrcp.pop %v1426
      %v1503 = vrcp.pop %v1429
      %v1504 = vrcp.pop %v1432
      %v1505 = vrcp.pop %v1435
      %v1506 = vrcp.pop %v1438
      %v1507 = vrcp.pop %v1441
      %v1508 = vrcp.pop %v1444
      %v1509 = vrcp.pop %v1447
      %v1510 = vrcp.pop %v1450
      %v1511 = vrcp.pop %v1453
      %v1512 = vrcp.pop %v1456
      %v1513 = vrcp.pop %v1459
      %v1514 = vrcp.pop %v1462
      %v1515 = vrcp.pop %v1465
      %v1516 = vrcp.pop %v1468
      %v1517 = vrcp.pop %v1471
      %v1518 = vrcp.pop %v1474
      %v1519 = vrcp.pop %v1477
      %v1520 = vrcp.pop %v1480
      %v1521 = vrcp.pop %v1483
      %v1522 = vrcp.pop %v1486
      %v1523 = vrcp.pop %v1489
      %v1524 = vrcp.pop %v1492
      %v1525 = vmul.f32 %v1334, %v1493
      %v1526 = vmul.f32 %v1336, %v1494
      %v1527 = vmul.f32 %v1338, %v1495
      %v1528 = vmul.f32 %v1340, %v1496
      %v1529 = vmul.f32 %v1342, %v1497
      %v1530 = vmul.f32 %v1344, %v1498
      %v1531 = vmul.f32 %v1346, %v1499
      %v1532 = vmul.f32 %v1348, %v1500
      %v1533 = vmul.f32 %v1350, %v1501
      %v1534 = vmul.f32 %v1352, %v1502
      %v1535 = vmul.f32 %v1354, %v1503
      %v1536 = vmul.f32 %v1356, %v1504
      %v1537 = vmul.f32 %v1358, %v1505
      %v1538 = vmul.f32 %v1360, %v1506
      %v1539 = vmul.f32 %v1362, %v1507
      %v1540 = vmul.f32 %v1364, %v1508
      %v1541 = vmul.f32 %v1366, %v1509
      %v1542 = vmul.f32 %v1368, %v1510
      %v1543 = vmul.f32 %v1370, %v1511
      %v1544 = vmul.f32 %v1372, %v1512
      %v1545 = vmul.f32 %v1374, %v1513
      %v1546 = vmul.f32 %v1376, %v1514
      %v1547 = vmul.f32 %v1378, %v1515
      %v1548 = vmul.f32 %v1380, %v1516
      %v1549 = vmul.f32 %v1382, %v1517
      %v1550 = vmul.f32 %v1384, %v1518
      %v1551 = vmul.f32 %v1386, %v1519
      %v1552 = vmul.f32 %v1388, %v1520
      %v1553 = vmul.f32 %v1390, %v1521
      %v1554 = vmul.f32 %v1392, %v1522
      %v1555 = vmul.f32 %v1394, %v1523
      %v1556 = vmul.f32 %v1396, %v1524
      %1557 = vrot.lane.b32.xlu0 %v882, 126
      %v1558 = vpop.permute.xlu0 %1557
      %1559 = vrot.lane.b32.xlu0 %v883, 126
      %v1560 = vpop.permute.xlu0 %1559
      %1561 = vrot.lane.b32.xlu0 %v884, 126
      %v1562 = vpop.permute.xlu0 %1561
      %1563 = vrot.lane.b32.xlu0 %v885, 126
      %v1564 = vpop.permute.xlu0 %1563
      %1565 = vrot.lane.b32.xlu0 %v886, 126
      %v1566 = vpop.permute.xlu0 %1565
      %1567 = vrot.lane.b32.xlu0 %v887, 126
      %v1568 = vpop.permute.xlu0 %1567
      %1569 = vrot.lane.b32.xlu0 %v888, 126
      %v1570 = vpop.permute.xlu0 %1569
      %1571 = vrot.lane.b32.xlu0 %v889, 126
      %v1572 = vpop.permute.xlu0 %1571
      %v1582 = vsel %vm1204, %v1525, 0
      %v1585 = vsel %vm1204, %v1526, 0
      %v1588 = vsel %vm1204, %v1527, 0
      %v1591 = vsel %vm1204, %v1528, 0
      %v1594 = vsel %vm1204, %v1529, 0
      %v1597 = vsel %vm1204, %v1530, 0
      %v1600 = vsel %vm1204, %v1531, 0
      %v1603 = vsel %vm1204, %v1532, 0
      %v1606 = vsel %vm1204, %v1533, 0
      %v1609 = vsel %vm1204, %v1534, 0
      %v1612 = vsel %vm1204, %v1535, 0
      %v1615 = vsel %vm1204, %v1536, 0
      %v1618 = vsel %vm1204, %v1537, 0
      %v1621 = vsel %vm1204, %v1538, 0
      %v1624 = vsel %vm1204, %v1539, 0
      %v1627 = vsel %vm1204, %v1540, 0
      %v1630 = vsel %vm1204, %v1541, 0
      %v1633 = vsel %vm1204, %v1542, 0
      %v1636 = vsel %vm1204, %v1543, 0
      %v1639 = vsel %vm1204, %v1544, 0
      %v1642 = vsel %vm1204, %v1545, 0
      %v1645 = vsel %vm1204, %v1546, 0
      %v1648 = vsel %vm1204, %v1547, 0
      %v1651 = vsel %vm1204, %v1548, 0
      %v1654 = vsel %vm1204, %v1549, 0
      %v1657 = vsel %vm1204, %v1550, 0
      %v1660 = vsel %vm1204, %v1551, 0
      %v1663 = vsel %vm1204, %v1552, 0
      %v1666 = vsel %vm1204, %v1553, 0
      %v1669 = vsel %vm1204, %v1554, 0
      %v1672 = vsel %vm1204, %v1555, 0
      %v1675 = vsel %vm1204, %v1556, 0
      %1677 = vmatprep.subr.mxu0 0.0
      %1678 = vmatpush1.msra.mxu0 %v1558
      %1679 = vmatprep.subr.mxu0 0.0
      %1680 = vmatpush1.msra.mxu0 %v1560
      %1681 = vmatprep.subr.mxu0 0.0
      %1682 = vmatpush1.msra.mxu0 %v1562
      %1683 = vmatprep.subr.mxu0 0.0
      %1684 = vmatpush1.msra.mxu0 %v1564
      %1685 = vmatprep.subr.mxu0 0.0
      %1686 = vmatpush1.msra.mxu0 %v1566
      %1687 = vmatprep.subr.mxu0 0.0
      %1688 = vmatpush1.msra.mxu0 %v1568
      %1689 = vmatprep.subr.mxu0 0.0
      %1690 = vmatpush1.msra.mxu0 %v1570
      %1691 = vmatprep.subr.mxu0 0.0
      %1692 = vmatpush1.msra.mxu0 %v1572
      %1693 = vmatprep.subr.mxu0 0.0
      %1694 = vmatpush1.msra.mxu0 0.0
      %1695 = vmatprep.subr.mxu0 0.0
      %1696 = vmatpush1.msra.mxu0 0.0
      %1697 = vmatprep.subr.mxu0 0.0
      %1698 = vmatpush1.msra.mxu0 0.0
      %1699 = vmatprep.subr.mxu0 0.0
      %1700 = vmatpush1.msra.mxu0 0.0
      %1701 = vmatprep.subr.mxu0 0.0
      %1702 = vmatpush1.msra.mxu0 0.0
      %1703 = vmatprep.subr.mxu0 0.0
      %1704 = vmatpush1.msra.mxu0 0.0
      %1705 = vmatprep.subr.mxu0 0.0
      %1706 = vmatpush1.msra.mxu0 0.0
      %1707 = vmatprep.subr.mxu0 0.0
      %1708 = vmatpush1.msra.mxu0 0.0
      %1709 = vmatprep.subr.mxu0 0.0
      %1710 = vmatpush1.msra.mxu0 0.0
      %1711 = vmatprep.subr.mxu0 0.0
      %1712 = vmatpush1.msra.mxu0 0.0
      %1713 = vmatprep.subr.mxu0 0.0
      %1714 = vmatpush1.msra.mxu0 0.0
      %1715 = vmatprep.subr.mxu0 0.0
      %1716 = vmatpush1.msra.mxu0 0.0
      %1717 = vmatprep.subr.mxu0 0.0
      %1718 = vmatpush1.msra.mxu0 0.0
      %1719 = vmatprep.subr.mxu0 0.0
      %1720 = vmatpush1.msra.mxu0 0.0
      %1721 = vmatprep.subr.mxu0 0.0
      %1722 = vmatpush1.msra.mxu0 0.0
      %1723 = vmatprep.subr.mxu0 0.0
      %1724 = vmatpush1.msra.mxu0 0.0
      %1725 = vmatprep.subr.mxu0 0.0
      %1726 = vmatpush1.msra.mxu0 0.0
      %1727 = vmatprep.subr.mxu0 0.0
      %1728 = vmatpush1.msra.mxu0 0.0
      %1729 = vmatprep.subr.mxu0 0.0
      %1730 = vmatpush1.msra.mxu0 0.0
      %1731 = vmatprep.subr.mxu0 0.0
      %1732 = vmatpush1.msra.mxu0 0.0
      %1733 = vmatprep.subr.mxu0 0.0
      %1734 = vmatpush1.msra.mxu0 0.0
      %1735 = vmatprep.subr.mxu0 0.0
      %1736 = vmatpush1.msra.mxu0 0.0
      %1737 = vmatprep.subr.mxu0 0.0
      %1738 = vmatpush1.msra.mxu0 0.0
      %1739 = vmatprep.subr.mxu0 0.0
      %1740 = vmatpush1.msra.mxu0 0.0
      %1741 = vmatprep.mubr.f32.mxu0 0.0
      %1742 = vmatmul.mubr.f32.gmra.mrb[0].mxu0 %v1582
      %v1743 = vpop.f32.mrb[0].mxu0
      %v1744 = vadd.f32 0.0, %v1743
      %v1745 = vpop.f32.mrb[0].mxu0
      %1746 = vmatprep.mubr.f32.mxu0 0.0
      %1747 = vmatmul.mubr.f32.gmra.mrb[0].mxu0 %v1585
      %v1748 = vpop.f32.mrb[0].mxu0
      %v1749 = vadd.f32 0.0, %v1748
      %v1750 = vpop.f32.mrb[0].mxu0
      %1751 = vmatprep.mubr.f32.mxu0 0.0
      %1752 = vmatmul.mubr.f32.gmra.mrb[0].mxu0 %v1588
      %v1753 = vpop.f32.mrb[0].mxu0
      %v1754 = vadd.f32 0.0, %v1753
      %v1755 = vpop.f32.mrb[0].mxu0
      %1756 = vmatprep.mubr.f32.mxu0 0.0
      %1757 = vmatmul.mubr.f32.gmra.mrb[0].mxu0 %v1591
      %v1758 = vpop.f32.mrb[0].mxu0
      %v1759 = vadd.f32 0.0, %v1758
      %v1760 = vpop.f32.mrb[0].mxu0
      %1761 = vmatprep.mubr.f32.mxu0 0.0
      %1762 = vmatmul.mubr.f32.gmra.mrb[0].mxu0 %v1594
      %v1763 = vpop.f32.mrb[0].mxu0
      %v1764 = vadd.f32 0.0, %v1763
      %v1765 = vpop.f32.mrb[0].mxu0
      %1766 = vmatprep.mubr.f32.mxu0 0.0
      %1767 = vmatmul.mubr.f32.gmra.mrb[0].mxu0 %v1597
      %v1768 = vpop.f32.mrb[0].mxu0
      %v1769 = vadd.f32 0.0, %v1768
      %v1770 = vpop.f32.mrb[0].mxu0
      %1771 = vmatprep.mubr.f32.mxu0 0.0
      %1772 = vmatmul.mubr.f32.gmra.mrb[0].mxu0 %v1600
      %v1773 = vpop.f32.mrb[0].mxu0
      %v1774 = vadd.f32 0.0, %v1773
      %v1775 = vpop.f32.mrb[0].mxu0
      %1776 = vmatprep.mubr.f32.mxu0 0.0
      %1777 = vmatmul.mubr.f32.gmra.mrb[0].mxu0 %v1603
      %v1778 = vpop.f32.mrb[0].mxu0
      %v1779 = vadd.f32 0.0, %v1778
      %v1780 = vpop.f32.mrb[0].mxu0
      %1781 = vmatprep.mubr.f32.mxu0 0.0
      %1782 = vmatmul.mubr.f32.gmra.mrb[0].mxu0 %v1606
      %v1783 = vpop.f32.mrb[0].mxu0
      %v1784 = vadd.f32 0.0, %v1783
      %v1785 = vpop.f32.mrb[0].mxu0
      %1786 = vmatprep.mubr.f32.mxu0 0.0
      %1787 = vmatmul.mubr.f32.gmra.mrb[0].mxu0 %v1609
      %v1788 = vpop.f32.mrb[0].mxu0
      %v1789 = vadd.f32 0.0, %v1788
      %v1790 = vpop.f32.mrb[0].mxu0
      %1791 = vmatprep.mubr.f32.mxu0 0.0
      %1792 = vmatmul.mubr.f32.gmra.mrb[0].mxu0 %v1612
      %v1793 = vpop.f32.mrb[0].mxu0
      %v1794 = vadd.f32 0.0, %v1793
      %v1795 = vpop.f32.mrb[0].mxu0
      %1796 = vmatprep.mubr.f32.mxu0 0.0
      %1797 = vmatmul.mubr.f32.gmra.mrb[0].mxu0 %v1615
      %v1798 = vpop.f32.mrb[0].mxu0
      %v1799 = vadd.f32 0.0, %v1798
      %v1800 = vpop.f32.mrb[0].mxu0
      %1801 = vmatprep.mubr.f32.mxu0 0.0
      %1802 = vmatmul.mubr.f32.gmra.mrb[0].mxu0 %v1618
      %v1803 = vpop.f32.mrb[0].mxu0
      %v1804 = vadd.f32 0.0, %v1803
      %v1805 = vpop.f32.mrb[0].mxu0
      %1806 = vmatprep.mubr.f32.mxu0 0.0
      %1807 = vmatmul.mubr.f32.gmra.mrb[0].mxu0 %v1621
      %v1808 = vpop.f32.mrb[0].mxu0
      %v1809 = vadd.f32 0.0, %v1808
      %v1810 = vpop.f32.mrb[0].mxu0
      %1811 = vmatprep.mubr.f32.mxu0 0.0
      %1812 = vmatmul.mubr.f32.gmra.mrb[0].mxu0 %v1624
      %v1813 = vpop.f32.mrb[0].mxu0
      %v1814 = vadd.f32 0.0, %v1813
      %v1815 = vpop.f32.mrb[0].mxu0
      %1816 = vmatprep.mubr.f32.mxu0 0.0
      %1817 = vmatmul.mubr.f32.gmra.mrb[0].mxu0 %v1627
      %v1818 = vpop.f32.mrb[0].mxu0
      %v1819 = vadd.f32 0.0, %v1818
      %v1820 = vpop.f32.mrb[0].mxu0
      %1821 = vmatprep.mubr.f32.mxu0 0.0
      %1822 = vmatmul.mubr.f32.gmra.mrb[0].mxu0 %v1630
      %v1823 = vpop.f32.mrb[0].mxu0
      %v1824 = vadd.f32 0.0, %v1823
      %v1825 = vpop.f32.mrb[0].mxu0
      %1826 = vmatprep.mubr.f32.mxu0 0.0
      %1827 = vmatmul.mubr.f32.gmra.mrb[0].mxu0 %v1633
      %v1828 = vpop.f32.mrb[0].mxu0
      %v1829 = vadd.f32 0.0, %v1828
      %v1830 = vpop.f32.mrb[0].mxu0
      %1831 = vmatprep.mubr.f32.mxu0 0.0
      %1832 = vmatmul.mubr.f32.gmra.mrb[0].mxu0 %v1636
      %v1833 = vpop.f32.mrb[0].mxu0
      %v1834 = vadd.f32 0.0, %v1833
      %v1835 = vpop.f32.mrb[0].mxu0
      %1836 = vmatprep.mubr.f32.mxu0 0.0
      %1837 = vmatmul.mubr.f32.gmra.mrb[0].mxu0 %v1639
      %v1838 = vpop.f32.mrb[0].mxu0
      %v1839 = vadd.f32 0.0, %v1838
      %v1840 = vpop.f32.mrb[0].mxu0
      %1841 = vmatprep.mubr.f32.mxu0 0.0
      %1842 = vmatmul.mubr.f32.gmra.mrb[0].mxu0 %v1642
      %v1843 = vpop.f32.mrb[0].mxu0
      %v1844 = vadd.f32 0.0, %v1843
      %v1845 = vpop.f32.mrb[0].mxu0
      %1846 = vmatprep.mubr.f32.mxu0 0.0
      %1847 = vmatmul.mubr.f32.gmra.mrb[0].mxu0 %v1645
      %v1848 = vpop.f32.mrb[0].mxu0
      %v1849 = vadd.f32 0.0, %v1848
      %v1850 = vpop.f32.mrb[0].mxu0
      %1851 = vmatprep.mubr.f32.mxu0 0.0
      %1852 = vmatmul.mubr.f32.gmra.mrb[0].mxu0 %v1648
      %v1853 = vpop.f32.mrb[0].mxu0
      %v1854 = vadd.f32 0.0, %v1853
      %v1855 = vpop.f32.mrb[0].mxu0
      %1856 = vmatprep.mubr.f32.mxu0 0.0
      %1857 = vmatmul.mubr.f32.gmra.mrb[0].mxu0 %v1651
      %v1858 = vpop.f32.mrb[0].mxu0
      %v1859 = vadd.f32 0.0, %v1858
      %v1860 = vpop.f32.mrb[0].mxu0
      %1861 = vmatprep.mubr.f32.mxu0 0.0
      %1862 = vmatmul.mubr.f32.gmra.mrb[0].mxu0 %v1654
      %v1863 = vpop.f32.mrb[0].mxu0
      %v1864 = vadd.f32 0.0, %v1863
      %v1865 = vpop.f32.mrb[0].mxu0
      %1866 = vmatprep.mubr.f32.mxu0 0.0
      %1867 = vmatmul.mubr.f32.gmra.mrb[0].mxu0 %v1657
      %v1868 = vpop.f32.mrb[0].mxu0
      %v1869 = vadd.f32 0.0, %v1868
      %v1870 = vpop.f32.mrb[0].mxu0
      %1871 = vmatprep.mubr.f32.mxu0 0.0
      %1872 = vmatmul.mubr.f32.gmra.mrb[0].mxu0 %v1660
      %v1873 = vpop.f32.mrb[0].mxu0
      %v1874 = vadd.f32 0.0, %v1873
      %v1875 = vpop.f32.mrb[0].mxu0
      %1876 = vmatprep.mubr.f32.mxu0 0.0
      %1877 = vmatmul.mubr.f32.gmra.mrb[0].mxu0 %v1663
      %v1878 = vpop.f32.mrb[0].mxu0
      %v1879 = vadd.f32 0.0, %v1878
      %v1880 = vpop.f32.mrb[0].mxu0
      %1881 = vmatprep.mubr.f32.mxu0 0.0
      %1882 = vmatmul.mubr.f32.gmra.mrb[0].mxu0 %v1666
      %v1883 = vpop.f32.mrb[0].mxu0
      %v1884 = vadd.f32 0.0, %v1883
      %v1885 = vpop.f32.mrb[0].mxu0
      %1886 = vmatprep.mubr.f32.mxu0 0.0
      %1887 = vmatmul.mubr.f32.gmra.mrb[0].mxu0 %v1669
      %v1888 = vpop.f32.mrb[0].mxu0
      %v1889 = vadd.f32 0.0, %v1888
      %v1890 = vpop.f32.mrb[0].mxu0
      %1891 = vmatprep.mubr.f32.mxu0 0.0
      %1892 = vmatmul.mubr.f32.gmra.mrb[0].mxu0 %v1672
      %v1893 = vpop.f32.mrb[0].mxu0
      %v1894 = vadd.f32 0.0, %v1893
      %v1895 = vpop.f32.mrb[0].mxu0
      %1896 = vmatprep.mubr.f32.mxu0 0.0
      %1897 = vmatmul.mubr.f32.gmra.mrb[0].mxu0 %v1675
      %v1898 = vpop.f32.mrb[0].mxu0
      %v1899 = vadd.f32 0.0, %v1898
      %v1900 = vpop.f32.mrb[0].mxu0
      %1901 = vdwg.mxu0
      %v1902 = vld [vmem:[%s3] sm:$0xf]
      %v1903 = vld [vmem:[%s4] sm:$0xf]
      %1905 = vset.pattern.permute.xlu0 0
      %1906 = vperm.xlu0 %1905, %v1903
      %v1907 = vpop.permute.xlu0 %1906
      %v1910 = vsel %vm890, %v1902, 0
      %v1913 = vsel %vm890, %v1744, 0
      %v1916 = vsel %vm890, %v1749, 0
      %v1919 = vsel %vm890, %v1754, 0
      %v1922 = vsel %vm890, %v1759, 0
      %v1925 = vsel %vm890, %v1764, 0
      %v1928 = vsel %vm890, %v1769, 0
      %v1931 = vsel %vm890, %v1774, 0
      %v1934 = vsel %vm890, %v1779, 0
      %v1937 = vsel %vm890, %v1784, 0
      %v1940 = vsel %vm890, %v1789, 0
      %v1943 = vsel %vm890, %v1794, 0
      %v1946 = vsel %vm890, %v1799, 0
      %v1949 = vsel %vm890, %v1804, 0
      %v1952 = vsel %vm890, %v1809, 0
      %v1955 = vsel %vm890, %v1814, 0
      %v1958 = vsel %vm890, %v1819, 0
      %v1961 = vsel %vm890, %v1824, 0
      %v1964 = vsel %vm890, %v1829, 0
      %v1967 = vsel %vm890, %v1834, 0
      %v1970 = vsel %vm890, %v1839, 0
      %v1973 = vsel %vm890, %v1844, 0
      %v1976 = vsel %vm890, %v1849, 0
      %v1979 = vsel %vm890, %v1854, 0
      %v1982 = vsel %vm890, %v1859, 0
      %v1985 = vsel %vm890, %v1864, 0
      %v1988 = vsel %vm890, %v1869, 0
      %v1991 = vsel %vm890, %v1874, 0
      %v1994 = vsel %vm890, %v1879, 0
      %v1997 = vsel %vm890, %v1884, 0
      %v2000 = vsel %vm890, %v1889, 0
      %v2003 = vsel %vm890, %v1894, 0
      %v2006 = vsel %vm890, %v1899, 0
      %2008 = vmatprep.subr.mxu0 0.0
      %2009 = vmatpush1.xpose.msra.mxu0 %v1913
      %2010 = vmatprep.subr.mxu0 0.0
      %2011 = vmatpush1.xpose.msra.mxu0 %v1916
      %2012 = vmatprep.subr.mxu0 0.0
      %2013 = vmatpush1.xpose.msra.mxu0 %v1919
      %2014 = vmatprep.subr.mxu0 0.0
      %2015 = vmatpush1.xpose.msra.mxu0 %v1922
      %2016 = vmatprep.subr.mxu0 0.0
      %2017 = vmatpush1.xpose.msra.mxu0 %v1925
      %2018 = vmatprep.subr.mxu0 0.0
      %2019 = vmatpush1.xpose.msra.mxu0 %v1928
      %2020 = vmatprep.subr.mxu0 0.0
      %2021 = vmatpush1.xpose.msra.mxu0 %v1931
      %2022 = vmatprep.subr.mxu0 0.0
      %2023 = vmatpush1.xpose.msra.mxu0 %v1934
      %2024 = vmatprep.subr.mxu0 0.0
      %2025 = vmatpush1.xpose.msra.mxu0 %v1937
      %2026 = vmatprep.subr.mxu0 0.0
      %2027 = vmatpush1.xpose.msra.mxu0 %v1940
      %2028 = vmatprep.subr.mxu0 0.0
      %2029 = vmatpush1.xpose.msra.mxu0 %v1943
      %2030 = vmatprep.subr.mxu0 0.0
      %2031 = vmatpush1.xpose.msra.mxu0 %v1946
      %2032 = vmatprep.subr.mxu0 0.0
      %2033 = vmatpush1.xpose.msra.mxu0 %v1949
      %2034 = vmatprep.subr.mxu0 0.0
      %2035 = vmatpush1.xpose.msra.mxu0 %v1952
      %2036 = vmatprep.subr.mxu0 0.0
      %2037 = vmatpush1.xpose.msra.mxu0 %v1955
      %2038 = vmatprep.subr.mxu0 0.0
      %2039 = vmatpush1.xpose.msra.mxu0 %v1958
      %2040 = vmatprep.subr.mxu0 0.0
      %2041 = vmatpush1.xpose.msra.mxu0 %v1961
      %2042 = vmatprep.subr.mxu0 0.0
      %2043 = vmatpush1.xpose.msra.mxu0 %v1964
      %2044 = vmatprep.subr.mxu0 0.0
      %2045 = vmatpush1.xpose.msra.mxu0 %v1967
      %2046 = vmatprep.subr.mxu0 0.0
      %2047 = vmatpush1.xpose.msra.mxu0 %v1970
      %2048 = vmatprep.subr.mxu0 0.0
      %2049 = vmatpush1.xpose.msra.mxu0 %v1973
      %2050 = vmatprep.subr.mxu0 0.0
      %2051 = vmatpush1.xpose.msra.mxu0 %v1976
      %2052 = vmatprep.subr.mxu0 0.0
      %2053 = vmatpush1.xpose.msra.mxu0 %v1979
      %2054 = vmatprep.subr.mxu0 0.0
      %2055 = vmatpush1.xpose.msra.mxu0 %v1982
      %2056 = vmatprep.subr.mxu0 0.0
      %2057 = vmatpush1.xpose.msra.mxu0 %v1985
      %2058 = vmatprep.subr.mxu0 0.0
      %2059 = vmatpush1.xpose.msra.mxu0 %v1988
      %2060 = vmatprep.subr.mxu0 0.0
      %2061 = vmatpush1.xpose.msra.mxu0 %v1991
      %2062 = vmatprep.subr.mxu0 0.0
      %2063 = vmatpush1.xpose.msra.mxu0 %v1994
      %2064 = vmatprep.subr.mxu0 0.0
      %2065 = vmatpush1.xpose.msra.mxu0 %v1997
      %2066 = vmatprep.subr.mxu0 0.0
      %2067 = vmatpush1.xpose.msra.mxu0 %v2000
      %2068 = vmatprep.subr.mxu0 0.0
      %2069 = vmatpush1.xpose.msra.mxu0 %v2003
      %2070 = vmatprep.subr.mxu0 0.0
      %2071 = vmatpush1.xpose.msra.mxu0 %v2006
      %2072 = vmatprep.mubr.f32.mxu0 0.0
      %2073 = vmatmul.mubr.f32.gmra.mrb[0].mxu0 %v1910
      %v2074 = vpop.f32.mrb[0].mxu0
      %v2075 = vadd.f32 %v1907, %v2074
      %v2076 = vpop.f32.mrb[0].mxu0
      %v2077 = vadd.f32 %v1907, %v2076
      %2078 = vdwg.mxu0
      %v2079 = vadd.f32 %v2075, %v225
      %v2080 = vadd.f32 %v2077, %v235
      %v2083 = vcombine.low %v2079, %v2080
      %2085 = vst [vmem:[%s224] sm:$0xff] %v2083
      %p2086 = scmp.lt.s32.totalorder %s16, 1
      %s2087 = scalar_select %p2086, %s16, 1
      %s2088 = smul.addr %s2087, 2
      %s2089 = smul.addr %s2088, 4
      %s2090 = scalar_lea.vmem %s5, %s2089
      // Predicated region
      $region41: #{non_local_block.1} parent=39 // pred_check
        %p2091 = pneg %p144
      $region42: #{non_local_block.1} parent=39 // pred_check_branch
        %2093 = sbr.rel (%p2091) target = $region44
      $region43: #{non_local_block.1} parent=39 // pred_region
        _
      $region44: #{non_local_block.1} parent=39 // pred_fallthru
        _
    $region40: #{non_local_block.1} parent=5 // pred_fallthru
      _
    %p2094 = scmp.le.s32.totalorder 2, %s11
    // Predicated region
    $region45: #{non_local_block.1} parent=5 // pred_check
      %p2095 = pneg %p2094
    $region46: #{non_local_block.1} parent=5 // pred_check_branch
      %2097 = sbr.rel (%p2095) target = $region48
    $region47: #{non_local_block.1} parent=5 // pred_region
      %s2098 = ssub.s32 %s11, 2
      // Predicated region
      $region49: #{non_local_block.1} parent=47 // pred_check
        %p2099 = pneg %p150
      $region50: #{non_local_block.1} parent=47 // pred_check_branch
        %2101 = sbr.rel (%p2099) target = $region52
      $region51: #{non_local_block.1} parent=47 // pred_region
        %p2102 = scmp.lt.s32.totalorder %s17, 1
        %s2103 = scalar_select %p2102, %s17, 1
        %s2104 = smul.addr %s2103, 2
        %s2105 = smul.addr %s2104, 4
        %s2106 = scalar_lea.vmem %s5, %s2105
      $region52: #{non_local_block.1} parent=47 // pred_fallthru
        _
    $region48: #{non_local_block.1} parent=5 // pred_fallthru
      _
  $region6: #{non_local_block.1} parent=0 // loop_footer
    %s15 = sadd.s32 1, %s11
  $region7: #{non_local_block.1} parent=0 // loop_footer_branch
    %10 = sbr.rel target = $region3
  $region8: #{non_local_block.1} parent=0 // loop_exit
    _

</llo_original>
